<compile_context>
chip_gen: v5e
topology: v5e:2x2
jax: 0.10.0
libtpu: 0.0.40
codegen_flags: <defaults>
</compile_context>

<pallas_src>
import functools

import jax
import jax.numpy as jnp
from jax.experimental import pallas as pl
from jax.experimental.pallas import tpu as pltpu

NEG_INF = -1e9            # masked-score fill; scores/softmax are f32 so this is safe
LANE = 128                # lane-dense slab / output width
P_ROWS_PER_LAYER = 8      # f32 slab rows per layer: ln1_g, ln1_b, bqkv, bo, ln2_g, ln2_b, b1, b2


# ----------------------------- kernel ------------------------------

def _layernorm(x, g, b, eps=1e-5):
    mu = jnp.mean(x, axis=-1, keepdims=True)
    var = jnp.mean((x - mu) ** 2, axis=-1, keepdims=True)
    return (x - mu) * jax.lax.rsqrt(var + eps) * g + b


def _fused_dt_kernel(x_ref, pslab_ref, wslab_ref, out_ref, xs_ref, *,
                     num_layers, num_heads, d_ff, batch, seq_len):
    """Whole Decision-Transformer forward (all layers + final LN + action proj), one call.

    x_ref     : (N, D)   f32 trajectory tokens, N = batch * 3 * timesteps
    pslab_ref : (8*NL+2, 128) f32   biases / LayerNorm params, one row each (zero lane-pad)
    wslab_ref : (NL*(3D+FF)+D, 128) bf16   wqkv|wo|w1|w2 per layer then wproj (zero lane-pad)
    out_ref   : (N/3, 128) f32   lane-dense action scores for the action tokens only
    xs_ref    : (N, D)   f32 VMEM scratch used for the strided action-token gather
    """
    x = x_ref[...]                                   # (N, D) f32, resident for all layers
    N, D = x.shape
    FF = d_ff
    H = num_heads
    hd = D // H
    scale = 1.0 / float(hd) ** 0.5
    bf16 = jnp.bfloat16
    n_act = N // 3                                   # number of action tokens (= B * T)

    # ---- block-diagonal causal mask generated in-kernel (iota + compares, no DMA) ----
    row_id = jax.lax.broadcasted_iota(jnp.int32, (N, N), 0)
    col_id = jax.lax.broadcasted_iota(jnp.int32, (N, N), 1)
    causal = col_id <= row_id
    # Given causal (col <= row), "both in batch-block b" reduces to col >= b*L and row < (b+1)*L.
    blocks = [(col_id >= b * seq_len) & (row_id < (b + 1) * seq_len) for b in range(batch)]
    allowed = functools.reduce(lambda a, c: a | c, blocks) & causal      # (N, N) bool

    w_rows = 3 * D + FF                              # bf16 slab rows per layer

    for l in range(num_layers):                      # static unroll: weights stay VMEM-resident
        pw = l * w_rows
        pp = l * P_ROWS_PER_LAYER
        # Per-layer params loaded ONCE into named values (each used once -> no duplicated
        # broadcast_in_dim from the static unroll).
        ln1_g = pslab_ref[pp + 0, 0:D]
        ln1_b = pslab_ref[pp + 1, 0:D]
        bqkv  = pslab_ref[pp + 2, 0:3 * D]
        bo    = pslab_ref[pp + 3, 0:D]
        ln2_g = pslab_ref[pp + 4, 0:D]
        ln2_b = pslab_ref[pp + 5, 0:D]
        b1    = pslab_ref[pp + 6, 0:FF]
        b2    = pslab_ref[pp + 7, 0:D]
        wqkv  = wslab_ref[pw + 0:pw + D,          0:3 * D]    # (D, 3D) bf16
        wo    = wslab_ref[pw + D:pw + 2 * D,      0:D]        # (D, D)  bf16
        w1    = wslab_ref[pw + 2 * D:pw + 3 * D,  0:FF]       # (D, FF) bf16
        w2    = wslab_ref[pw + 3 * D:pw + 3 * D + FF, 0:D]    # (FF, D) bf16

        # ---- masked multi-head self-attention (pre-norm + residual) ----
        h = _layernorm(x, ln1_g, ln1_b)
        qkv = jnp.dot(h.astype(bf16), wqkv, preferred_element_type=jnp.float32) + bqkv
        qkv_bf = qkv.astype(bf16)
        q = qkv_bf[:, 0:D]                            # q/k/v sliced once, outside the head loop
        k = qkv_bf[:, D:2 * D]
        v = qkv_bf[:, 2 * D:3 * D]
        o_heads = []
        for hh in range(H):                           # tiny static loop (H = 2)
            sl = slice(hh * hd, (hh + 1) * hd)
            # NT matmul via dot_general: contract last dims, no explicit k.T transpose.
            s = jax.lax.dot_general(q[:, sl], k[:, sl], (((1,), (1,)), ((), ())),
                                    preferred_element_type=jnp.float32)   # (N, N) f32
            s = jnp.where(allowed, s * scale, NEG_INF)
            s = s - jnp.max(s, axis=-1, keepdims=True)
            p = jnp.exp(s)
            p = p * pl.reciprocal(jnp.sum(p, axis=-1, keepdims=True), approx=True)
            o_heads.append(jnp.dot(p.astype(bf16), v[:, sl],
                                   preferred_element_type=jnp.float32))   # (N, hd) f32
        # Re-merge heads with one lane-concat, then a single (N,D)@(D,D) W_o matmul.
        o = jnp.concatenate(o_heads, axis=-1).astype(bf16)
        x = x + jnp.dot(o, wo, preferred_element_type=jnp.float32) + bo

        # ---- position-wise feed-forward (pre-norm + residual) ----
        h2 = _layernorm(x, ln2_g, ln2_b)
        f = jnp.dot(h2.astype(bf16), w1, preferred_element_type=jnp.float32) + b1
        f = jnp.maximum(f, 0.0)
        x = x + jnp.dot(f.astype(bf16), w2, preferred_element_type=jnp.float32) + b2

    # ---- in-kernel action-token gather (rows 2, 5, 8, ...): final LN + projection run
    #      only on the n_act gathered rows, output DMA shrinks 3x ----
    xs_ref[...] = x
    xa = xs_ref[pl.ds(2, n_act, stride=3), :]                          # strided VMEM read
    lnf_g = pslab_ref[num_layers * P_ROWS_PER_LAYER + 0, 0:D]
    lnf_b = pslab_ref[num_layers * P_ROWS_PER_LAYER + 1, 0:D]
    xn = _layernorm(xa, lnf_g, lnf_b)
    wproj = wslab_ref[num_layers * w_rows:num_layers * w_rows + D, :]  # (D, 128) bf16
    out_ref[...] = jnp.dot(xn.astype(bf16), wproj, preferred_element_type=jnp.float32)


# ------------------------------ pallas wrapper -----------------------------

def fused_forward(x_flat, pslab, wslab, *, num_layers, num_heads, d_ff, batch, seq_len):
    """x_flat: (N, D) f32 tokens; pslab: f32 param slab; wslab: bf16 weight slab."""
    N, D = x_flat.shape
    n_act = N // 3
    vmem = pl.BlockSpec(memory_space=pltpu.MemorySpace.VMEM)   # whole arrays resident in VMEM
    return pl.pallas_call(
        functools.partial(_fused_dt_kernel, num_layers=num_layers, num_heads=num_heads,
                          d_ff=d_ff, batch=batch, seq_len=seq_len),
        out_shape=jax.ShapeDtypeStruct((n_act, LANE), jnp.float32),
        in_specs=[vmem, vmem, vmem],
        out_specs=vmem,
        scratch_shapes=[pltpu.VMEM((N, D), jnp.float32)],
    )(x_flat, pslab, wslab)


# ------------------------------- params ---------------------------------

def init_params(key, *, state_dim, num_actions, d_model, d_ff, num_layers, num_tokens):
    def normal(k, shape, scale=0.02):
        return (scale * jax.random.normal(k, shape)).astype(jnp.float32)

    keys = iter(jax.random.split(key, 64))
    params = {
        "W_s": normal(next(keys), (state_dim, d_model)),
        "b_s": jnp.zeros((1, 1, d_model), jnp.float32),
        "W_a": normal(next(keys), (num_actions, d_model)),     # discrete action embedding table
        "W_r": normal(next(keys), (1, d_model)),
        "b_r": jnp.zeros((1, 1, d_model), jnp.float32),
        "pos": normal(next(keys), (num_tokens, d_model)),
        "ln_f_g": jnp.ones((1, d_model), jnp.float32),
        "ln_f_b": jnp.zeros((1, d_model), jnp.float32),
        "W_proj": normal(next(keys), (d_model, num_actions)),  # action_proj (no bias)
        "layers": [],
    }
    for _ in range(num_layers):
        lp = {
            "wq": normal(next(keys), (d_model, d_model)),
            "bq": jnp.zeros((1, d_model), jnp.float32),
            "wk": normal(next(keys), (d_model, d_model)),
            "bk": jnp.zeros((1, d_model), jnp.float32),
            "wv": normal(next(keys), (d_model, d_model)),
            "bv": jnp.zeros((1, d_model), jnp.float32),
            "wo": normal(next(keys), (d_model, d_model)),
            "bo": jnp.zeros((1, d_model), jnp.float32),
            "ln1_g": jnp.ones((1, d_model), jnp.float32),
            "ln1_b": jnp.zeros((1, d_model), jnp.float32),
            "w1": normal(next(keys), (d_model, d_ff)),
            "b1": jnp.zeros((1, d_ff), jnp.float32),
            "w2": normal(next(keys), (d_ff, d_model)),
            "b2": jnp.zeros((1, d_model), jnp.float32),
            "ln2_g": jnp.ones((1, d_model), jnp.float32),
            "ln2_b": jnp.zeros((1, d_model), jnp.float32),
        }
        params["layers"].append(lp)
    return params


def pack_for_kernel(params):
    """Pack everything into exactly two kernel inputs:
      * one lane-dense f32 slab of bias / LayerNorm rows (8 rows per layer + 2 final-LN rows),
      * one lane-dense bf16 slab of matrices (fused wqkv | wo | w1 | w2 per layer, then wproj
        zero-padded to 128 output lanes)."""
    layers = params["layers"]
    D = params["W_s"].shape[1]
    FF = layers[0]["w1"].shape[1]
    assert 3 * D <= LANE and FF <= LANE, "slab packing assumes 3*d_model and d_ff fit in 128 lanes"
    assert D % 16 == 0 and FF % 16 == 0, "bf16 slab row offsets must align to sublane packing"

    def frow(v):
        v = jnp.reshape(v, (-1,)).astype(jnp.float32)
        return jnp.pad(v, (0, LANE - v.shape[0]))

    prows = []
    for lp in layers:
        prows += [frow(lp["ln1_g"]), frow(lp["ln1_b"]),
                  frow(jnp.concatenate([lp["bq"], lp["bk"], lp["bv"]], axis=1)),
                  frow(lp["bo"]), frow(lp["ln2_g"]), frow(lp["ln2_b"]),
                  frow(lp["b1"]), frow(lp["b2"])]
    prows += [frow(params["ln_f_g"]), frow(params["ln_f_b"])]
    pslab = jnp.stack(prows)                                           # (8*NL + 2, 128) f32

    def wblock(m):
        return jnp.pad(m, ((0, 0), (0, LANE - m.shape[1])))

    wblocks = []
    for lp in layers:
        wqkv = jnp.concatenate([lp["wq"], lp["wk"], lp["wv"]], axis=1)  # (D, 3D) fused QKV
        wblocks += [wblock(wqkv), wblock(lp["wo"]), wblock(lp["w1"]), wblock(lp["w2"])]
    wblocks.append(wblock(params["W_proj"]))                            # (D, A) -> (D, 128)
    wslab = jnp.concatenate(wblocks, axis=0).astype(jnp.bfloat16)       # (NL*(3D+FF)+D, 128)
    return {"pslab": pslab, "wslab": wslab}


# ------------------------------- model glue ---------------------------------

def decision_transformer_forward(params, packed, states, actions, returns2go, *,
                                 num_heads, num_actions, num_layers, d_ff):
    """states: (B,T,state_dim) f32, actions: (B,T) int32, returns2go: (B,T) f32.
    Returns action_scores of shape (B, T, num_actions) == proj(encoder_out[:, 2::3])."""
    B, T, _ = states.shape
    D = params["W_s"].shape[1]
    L = 3 * T

    # --- embeddings (plain-JAX glue): per-timestep token order (return, state, action) ---
    s_emb = jnp.einsum("bts,sd->btd", states, params["W_s"]) + params["b_s"]
    a_emb = params["W_a"][actions]                               # (B,T,D) discrete lookup
    r_emb = returns2go[..., None] @ params["W_r"] + params["b_r"]
    tok = jnp.stack([r_emb, s_emb, a_emb], axis=2)               # (B,T,3,D)
    traj = tok.reshape(B, L, D) + params["pos"][None, :L]

    # --- fused encoder + final LN + in-kernel action-token gather + padded projection ---
    x_flat = traj.reshape(B * L, D).astype(jnp.float32)
    out = fused_forward(x_flat, packed["pslab"], packed["wslab"],
                        num_layers=num_layers, num_heads=num_heads, d_ff=d_ff,
                        batch=B, seq_len=L)                      # (B*T, 128)

    # --- drop lane padding (tiny XLA slice; the arange(2, seq_len, 3) gather is in-kernel) ---
    return out.reshape(B, T, LANE)[:, :, :num_actions]           # (B, T, A)


# ---------------------------------- main -------------------------------------

if __name__ == "__main__":
    B, T = 2, 8            # batch, timesteps  -> token seq_len = 3*T = 24
    STATE_DIM = 4          # CartPole observation dim
    NUM_ACTIONS = 2        # CartPole discrete actions
    D_MODEL = 32
    D_FF = 64
    NUM_HEADS = 2
    NUM_LAYERS = 2

    key = jax.random.PRNGKey(0)
    k_p, k_s, k_a, k_r = jax.random.split(key, 4)

    params = init_params(k_p, state_dim=STATE_DIM, num_actions=NUM_ACTIONS,
                         d_model=D_MODEL, d_ff=D_FF, num_layers=NUM_LAYERS,
                         num_tokens=3 * T)
    packed = pack_for_kernel(params)

    states = jax.random.normal(k_s, (B, T, STATE_DIM), dtype=jnp.float32)
    actions = jax.random.randint(k_a, (B, T), 0, NUM_ACTIONS, dtype=jnp.int32)
    returns2go = jax.random.uniform(k_r, (B, T), dtype=jnp.float32)

    fwd = jax.jit(functools.partial(decision_transformer_forward,
                                    num_heads=NUM_HEADS, num_actions=NUM_ACTIONS,
                                    num_layers=NUM_LAYERS, d_ff=D_FF))
    action_scores = fwd(params, packed, states, actions, returns2go)
    action_scores = jax.block_until_ready(action_scores)

    assert action_scores.shape == (B, T, NUM_ACTIONS)
    assert action_scores.dtype == jnp.float32
    assert bool(jnp.all(jnp.isfinite(action_scores)))

    # predict()-style postprocessing (glue, not part of the hot path)
    probs = jax.nn.softmax(action_scores[:, -1], axis=-1)
    _ = jax.block_until_ready(jnp.argmax(probs, axis=-1))

    print("KERNEL_OK")
</pallas_src>

<mosaic_0001>
module attributes {stable_mosaic.version = 11 : i64} {
  func.func @_fused_dt_kernel(%arg0: memref<48x32xf32, #tpu.memory_space<vmem>>, %arg1: memref<18x128xf32, #tpu.memory_space<vmem>>, %arg2: memref<352x128xbf16, #tpu.memory_space<vmem>>, %arg3: memref<16x128xf32, #tpu.memory_space<vmem>>, %arg4: memref<48x32xf32, #tpu.memory_space<vmem>>) attributes {dimension_semantics = [], scalar_prefetch = 0 : i64, scratch_operands = 1 : i64, tpu.core_type = #tpu.core_type<tc>} {
    %c0 = arith.constant 0 : index
    %c0_0 = arith.constant 0 : index
    %0 = vector.load %arg0[%c0, %c0_0] : memref<48x32xf32, #tpu.memory_space<vmem>>, vector<48x32xf32>
    %1 = tpu.iota {dimensions = array<i32: 0>} : vector<48x48xi32>
    %2 = tpu.iota {dimensions = array<i32: 1>} : vector<48x48xi32>
    %3 = arith.cmpi sle, %2, %1 : vector<48x48xi32>
    %c0_i32 = arith.constant 0 : i32
    %4 = vector.broadcast %c0_i32 : i32 to vector<48x48xi32>
    %5 = arith.cmpi sge, %2, %4 : vector<48x48xi32>
    %c24_i32 = arith.constant 24 : i32
    %6 = vector.broadcast %c24_i32 : i32 to vector<48x48xi32>
    %7 = arith.cmpi slt, %1, %6 : vector<48x48xi32>
    %8 = arith.andi %5, %7 : vector<48x48xi1>
    %c24_i32_1 = arith.constant 24 : i32
    %9 = vector.broadcast %c24_i32_1 : i32 to vector<48x48xi32>
    %10 = arith.cmpi sge, %2, %9 : vector<48x48xi32>
    %c48_i32 = arith.constant 48 : i32
    %11 = vector.broadcast %c48_i32 : i32 to vector<48x48xi32>
    %12 = arith.cmpi slt, %1, %11 : vector<48x48xi32>
    %13 = arith.andi %10, %12 : vector<48x48xi1>
    %14 = arith.ori %8, %13 : vector<48x48xi1>
    %15 = arith.andi %14, %3 : vector<48x48xi1>
    %c0_2 = arith.constant 0 : index
    %c0_3 = arith.constant 0 : index
    %16 = vector.load %arg1[%c0_2, %c0_3] : memref<18x128xf32, #tpu.memory_space<vmem>>, vector<1x32xf32>
    %17 = vector.shape_cast %16 : vector<1x32xf32> to vector<32xf32>
    %c1 = arith.constant 1 : index
    %c0_4 = arith.constant 0 : index
    %18 = vector.load %arg1[%c1, %c0_4] : memref<18x128xf32, #tpu.memory_space<vmem>>, vector<1x32xf32>
    %19 = vector.shape_cast %18 : vector<1x32xf32> to vector<32xf32>
    %c2 = arith.constant 2 : index
    %c0_5 = arith.constant 0 : index
    %20 = vector.load %arg1[%c2, %c0_5] : memref<18x128xf32, #tpu.memory_space<vmem>>, vector<1x96xf32>
    %21 = vector.shape_cast %20 : vector<1x96xf32> to vector<96xf32>
    %c3 = arith.constant 3 : index
    %c0_6 = arith.constant 0 : index
    %22 = vector.load %arg1[%c3, %c0_6] : memref<18x128xf32, #tpu.memory_space<vmem>>, vector<1x32xf32>
    %23 = vector.shape_cast %22 : vector<1x32xf32> to vector<32xf32>
    %c4 = arith.constant 4 : index
    %c0_7 = arith.constant 0 : index
    %24 = vector.load %arg1[%c4, %c0_7] : memref<18x128xf32, #tpu.memory_space<vmem>>, vector<1x32xf32>
    %25 = vector.shape_cast %24 : vector<1x32xf32> to vector<32xf32>
    %c5 = arith.constant 5 : index
    %c0_8 = arith.constant 0 : index
    %26 = vector.load %arg1[%c5, %c0_8] : memref<18x128xf32, #tpu.memory_space<vmem>>, vector<1x32xf32>
    %27 = vector.shape_cast %26 : vector<1x32xf32> to vector<32xf32>
    %c6 = arith.constant 6 : index
    %c0_9 = arith.constant 0 : index
    %28 = vector.load %arg1[%c6, %c0_9] : memref<18x128xf32, #tpu.memory_space<vmem>>, vector<1x64xf32>
    %29 = vector.shape_cast %28 : vector<1x64xf32> to vector<64xf32>
    %c7 = arith.constant 7 : index
    %c0_10 = arith.constant 0 : index
    %30 = vector.load %arg1[%c7, %c0_10] : memref<18x128xf32, #tpu.memory_space<vmem>>, vector<1x32xf32>
    %31 = vector.shape_cast %30 : vector<1x32xf32> to vector<32xf32>
    %c0_11 = arith.constant 0 : index
    %c0_12 = arith.constant 0 : index
    %32 = vector.load %arg2[%c0_11, %c0_12] : memref<352x128xbf16, #tpu.memory_space<vmem>>, vector<32x96xbf16>
    %c32 = arith.constant 32 : index
    %c0_13 = arith.constant 0 : index
    %33 = vector.load %arg2[%c32, %c0_13] : memref<352x128xbf16, #tpu.memory_space<vmem>>, vector<32x32xbf16>
    %c64 = arith.constant 64 : index
    %c0_14 = arith.constant 0 : index
    %34 = vector.load %arg2[%c64, %c0_14] : memref<352x128xbf16, #tpu.memory_space<vmem>>, vector<32x64xbf16>
    %c96 = arith.constant 96 : index
    %c0_15 = arith.constant 0 : index
    %35 = vector.load %arg2[%c96, %c0_15] : memref<352x128xbf16, #tpu.memory_space<vmem>>, vector<64x32xbf16>
    %cst = arith.constant dense<0.000000e+00> : vector<48xf32>
    %36 = vector.multi_reduction <add>, %0, %cst [1] : vector<48x32xf32> to vector<48xf32>
    %37 = vector.shape_cast %36 : vector<48xf32> to vector<48x1xf32>
    %cst_16 = arith.constant 3.200000e+01 : f32
    %38 = vector.broadcast %cst_16 : f32 to vector<48x1xf32>
    %39 = arith.divf %37, %38 : vector<48x1xf32>
    %40 = vector.broadcast %39 : vector<48x1xf32> to vector<48x32xf32>
    %41 = arith.subf %0, %40 : vector<48x32xf32>
    %42 = arith.mulf %41, %41 : vector<48x32xf32>
    %cst_17 = arith.constant dense<0.000000e+00> : vector<48xf32>
    %43 = vector.multi_reduction <add>, %42, %cst_17 [1] : vector<48x32xf32> to vector<48xf32>
    %44 = vector.shape_cast %43 : vector<48xf32> to vector<48x1xf32>
    %cst_18 = arith.constant 3.200000e+01 : f32
    %45 = vector.broadcast %cst_18 : f32 to vector<48x1xf32>
    %46 = arith.divf %44, %45 : vector<48x1xf32>
    %47 = vector.broadcast %39 : vector<48x1xf32> to vector<48x32xf32>
    %48 = arith.subf %0, %47 : vector<48x32xf32>
    %cst_19 = arith.constant 9.99999974E-6 : f32
    %49 = vector.broadcast %cst_19 : f32 to vector<48x1xf32>
    %50 = arith.addf %46, %49 : vector<48x1xf32>
    %51 = math.rsqrt %50 : vector<48x1xf32>
    %52 = vector.broadcast %51 : vector<48x1xf32> to vector<48x32xf32>
    %53 = arith.mulf %48, %52 : vector<48x32xf32>
    %54 = vector.shape_cast %17 : vector<32xf32> to vector<1x32xf32>
    %55 = vector.broadcast %54 : vector<1x32xf32> to vector<48x32xf32>
    %56 = arith.mulf %53, %55 : vector<48x32xf32>
    %57 = vector.shape_cast %19 : vector<32xf32> to vector<1x32xf32>
    %58 = vector.broadcast %57 : vector<1x32xf32> to vector<48x32xf32>
    %59 = arith.addf %56, %58 : vector<48x32xf32>
    %60 = arith.truncf %59 : vector<48x32xf32> to vector<48x32xbf16>
    %cst_20 = arith.constant dense<0.000000e+00> : vector<48x96xf32>
    %61 = tpu.matmul %60, %32, %cst_20 {dimension_numbers = #tpu.dot_dimension_numbers<[1], [0], [0], [1], [0, 0, 1, 1], [], []>} : vector<48x32xbf16>, vector<32x96xbf16>, vector<48x96xf32> -> vector<48x96xf32>
    %62 = vector.shape_cast %21 : vector<96xf32> to vector<1x96xf32>
    %63 = vector.broadcast %62 : vector<1x96xf32> to vector<48x96xf32>
    %64 = arith.addf %61, %63 : vector<48x96xf32>
    %65 = arith.truncf %64 : vector<48x96xf32> to vector<48x96xbf16>
    %66 = vector.extract_strided_slice %65 {offsets = [0, 0], sizes = [48, 32], strides = [1, 1]} : vector<48x96xbf16> to vector<48x32xbf16>
    %67 = vector.extract_strided_slice %65 {offsets = [0, 32], sizes = [48, 32], strides = [1, 1]} : vector<48x96xbf16> to vector<48x32xbf16>
    %68 = vector.extract_strided_slice %65 {offsets = [0, 64], sizes = [48, 32], strides = [1, 1]} : vector<48x96xbf16> to vector<48x32xbf16>
    %69 = vector.extract_strided_slice %66 {offsets = [0, 0], sizes = [48, 16], strides = [1, 1]} : vector<48x32xbf16> to vector<48x16xbf16>
    %70 = vector.extract_strided_slice %67 {offsets = [0, 0], sizes = [48, 16], strides = [1, 1]} : vector<48x32xbf16> to vector<48x16xbf16>
    %cst_21 = arith.constant dense<0.000000e+00> : vector<48x48xf32>
    %71 = tpu.matmul %69, %70, %cst_21 {dimension_numbers = #tpu.dot_dimension_numbers<[1], [1], [0], [0], [0, 0, 1, 0], [], []>} : vector<48x16xbf16>, vector<48x16xbf16>, vector<48x48xf32> -> vector<48x48xf32>
    %cst_22 = arith.constant 2.500000e-01 : f32
    %72 = vector.broadcast %cst_22 : f32 to vector<48x48xf32>
    %73 = arith.mulf %71, %72 : vector<48x48xf32>
    %cst_23 = arith.constant -1.000000e+09 : f32
    %74 = vector.broadcast %cst_23 : f32 to vector<48x48xf32>
    %75 = arith.select %15, %73, %74 : vector<48x48xi1>, vector<48x48xf32>
    %cst_24 = arith.constant dense<0xFF800000> : vector<48xf32>
    %76 = vector.multi_reduction <maximumf>, %75, %cst_24 [1] : vector<48x48xf32> to vector<48xf32>
    %77 = vector.shape_cast %76 : vector<48xf32> to vector<48x1xf32>
    %78 = vector.broadcast %77 : vector<48x1xf32> to vector<48x48xf32>
    %79 = arith.subf %75, %78 : vector<48x48xf32>
    %80 = math.exp %79 : vector<48x48xf32>
    %cst_25 = arith.constant dense<0.000000e+00> : vector<48xf32>
    %81 = vector.multi_reduction <add>, %80, %cst_25 [1] : vector<48x48xf32> to vector<48xf32>
    %82 = vector.shape_cast %81 : vector<48xf32> to vector<48x1xf32>
    %83 = tpu.reciprocal %82 {approx = true} : vector<48x1xf32> -> vector<48x1xf32>
    %84 = vector.broadcast %83 : vector<48x1xf32> to vector<48x48xf32>
    %85 = arith.mulf %80, %84 : vector<48x48xf32>
    %86 = arith.truncf %85 : vector<48x48xf32> to vector<48x48xbf16>
    %87 = vector.extract_strided_slice %68 {offsets = [0, 0], sizes = [48, 16], strides = [1, 1]} : vector<48x32xbf16> to vector<48x16xbf16>
    %cst_26 = arith.constant dense<0.000000e+00> : vector<48x16xf32>
    %88 = tpu.matmul %86, %87, %cst_26 {dimension_numbers = #tpu.dot_dimension_numbers<[1], [0], [0], [1], [0, 0, 1, 1], [], []>} : vector<48x48xbf16>, vector<48x16xbf16>, vector<48x16xf32> -> vector<48x16xf32>
    %89 = vector.extract_strided_slice %66 {offsets = [0, 16], sizes = [48, 16], strides = [1, 1]} : vector<48x32xbf16> to vector<48x16xbf16>
    %90 = vector.extract_strided_slice %67 {offsets = [0, 16], sizes = [48, 16], strides = [1, 1]} : vector<48x32xbf16> to vector<48x16xbf16>
    %cst_27 = arith.constant dense<0.000000e+00> : vector<48x48xf32>
    %91 = tpu.matmul %89, %90, %cst_27 {dimension_numbers = #tpu.dot_dimension_numbers<[1], [1], [0], [0], [0, 0, 1, 0], [], []>} : vector<48x16xbf16>, vector<48x16xbf16>, vector<48x48xf32> -> vector<48x48xf32>
    %cst_28 = arith.constant 2.500000e-01 : f32
    %92 = vector.broadcast %cst_28 : f32 to vector<48x48xf32>
    %93 = arith.mulf %91, %92 : vector<48x48xf32>
    %cst_29 = arith.constant -1.000000e+09 : f32
    %94 = vector.broadcast %cst_29 : f32 to vector<48x48xf32>
    %95 = arith.select %15, %93, %94 : vector<48x48xi1>, vector<48x48xf32>
    %cst_30 = arith.constant dense<0xFF800000> : vector<48xf32>
    %96 = vector.multi_reduction <maximumf>, %95, %cst_30 [1] : vector<48x48xf32> to vector<48xf32>
    %97 = vector.shape_cast %96 : vector<48xf32> to vector<48x1xf32>
    %98 = vector.broadcast %97 : vector<48x1xf32> to vector<48x48xf32>
    %99 = arith.subf %95, %98 : vector<48x48xf32>
    %100 = math.exp %99 : vector<48x48xf32>
    %cst_31 = arith.constant dense<0.000000e+00> : vector<48xf32>
    %101 = vector.multi_reduction <add>, %100, %cst_31 [1] : vector<48x48xf32> to vector<48xf32>
    %102 = vector.shape_cast %101 : vector<48xf32> to vector<48x1xf32>
    %103 = tpu.reciprocal %102 {approx = true} : vector<48x1xf32> -> vector<48x1xf32>
    %104 = vector.broadcast %103 : vector<48x1xf32> to vector<48x48xf32>
    %105 = arith.mulf %100, %104 : vector<48x48xf32>
    %106 = arith.truncf %105 : vector<48x48xf32> to vector<48x48xbf16>
    %107 = vector.extract_strided_slice %68 {offsets = [0, 16], sizes = [48, 16], strides = [1, 1]} : vector<48x32xbf16> to vector<48x16xbf16>
    %cst_32 = arith.constant dense<0.000000e+00> : vector<48x16xf32>
    %108 = tpu.matmul %106, %107, %cst_32 {dimension_numbers = #tpu.dot_dimension_numbers<[1], [0], [0], [1], [0, 0, 1, 1], [], []>} : vector<48x48xbf16>, vector<48x16xbf16>, vector<48x16xf32> -> vector<48x16xf32>
    %109 = tpu.concatenate %88, %108 in 1 : vector<48x16xf32>, vector<48x16xf32> -> vector<48x32xf32>
    %110 = arith.truncf %109 : vector<48x32xf32> to vector<48x32xbf16>
    %cst_33 = arith.constant dense<0.000000e+00> : vector<48x32xf32>
    %111 = tpu.matmul %110, %33, %cst_33 {dimension_numbers = #tpu.dot_dimension_numbers<[1], [0], [0], [1], [0, 0, 1, 1], [], []>} : vector<48x32xbf16>, vector<32x32xbf16>, vector<48x32xf32> -> vector<48x32xf32>
    %112 = arith.addf %0, %111 : vector<48x32xf32>
    %113 = vector.shape_cast %23 : vector<32xf32> to vector<1x32xf32>
    %114 = vector.broadcast %113 : vector<1x32xf32> to vector<48x32xf32>
    %115 = arith.addf %112, %114 : vector<48x32xf32>
    %cst_34 = arith.constant dense<0.000000e+00> : vector<48xf32>
    %116 = vector.multi_reduction <add>, %115, %cst_34 [1] : vector<48x32xf32> to vector<48xf32>
    %117 = vector.shape_cast %116 : vector<48xf32> to vector<48x1xf32>
    %cst_35 = arith.constant 3.200000e+01 : f32
    %118 = vector.broadcast %cst_35 : f32 to vector<48x1xf32>
    %119 = arith.divf %117, %118 : vector<48x1xf32>
    %120 = vector.broadcast %119 : vector<48x1xf32> to vector<48x32xf32>
    %121 = arith.subf %115, %120 : vector<48x32xf32>
    %122 = arith.mulf %121, %121 : vector<48x32xf32>
    %cst_36 = arith.constant dense<0.000000e+00> : vector<48xf32>
    %123 = vector.multi_reduction <add>, %122, %cst_36 [1] : vector<48x32xf32> to vector<48xf32>
    %124 = vector.shape_cast %123 : vector<48xf32> to vector<48x1xf32>
    %cst_37 = arith.constant 3.200000e+01 : f32
    %125 = vector.broadcast %cst_37 : f32 to vector<48x1xf32>
    %126 = arith.divf %124, %125 : vector<48x1xf32>
    %127 = vector.broadcast %119 : vector<48x1xf32> to vector<48x32xf32>
    %128 = arith.subf %115, %127 : vector<48x32xf32>
    %cst_38 = arith.constant 9.99999974E-6 : f32
    %129 = vector.broadcast %cst_38 : f32 to vector<48x1xf32>
    %130 = arith.addf %126, %129 : vector<48x1xf32>
    %131 = math.rsqrt %130 : vector<48x1xf32>
    %132 = vector.broadcast %131 : vector<48x1xf32> to vector<48x32xf32>
    %133 = arith.mulf %128, %132 : vector<48x32xf32>
    %134 = vector.shape_cast %25 : vector<32xf32> to vector<1x32xf32>
    %135 = vector.broadcast %134 : vector<1x32xf32> to vector<48x32xf32>
    %136 = arith.mulf %133, %135 : vector<48x32xf32>
    %137 = vector.shape_cast %27 : vector<32xf32> to vector<1x32xf32>
    %138 = vector.broadcast %137 : vector<1x32xf32> to vector<48x32xf32>
    %139 = arith.addf %136, %138 : vector<48x32xf32>
    %140 = arith.truncf %139 : vector<48x32xf32> to vector<48x32xbf16>
    %cst_39 = arith.constant dense<0.000000e+00> : vector<48x64xf32>
    %141 = tpu.matmul %140, %34, %cst_39 {dimension_numbers = #tpu.dot_dimension_numbers<[1], [0], [0], [1], [0, 0, 1, 1], [], []>} : vector<48x32xbf16>, vector<32x64xbf16>, vector<48x64xf32> -> vector<48x64xf32>
    %142 = vector.shape_cast %29 : vector<64xf32> to vector<1x64xf32>
    %143 = vector.broadcast %142 : vector<1x64xf32> to vector<48x64xf32>
    %144 = arith.addf %141, %143 : vector<48x64xf32>
    %cst_40 = arith.constant 0.000000e+00 : f32
    %145 = vector.broadcast %cst_40 : f32 to vector<48x64xf32>
    %146 = arith.maximumf %144, %145 : vector<48x64xf32>
    %147 = arith.truncf %146 : vector<48x64xf32> to vector<48x64xbf16>
    %cst_41 = arith.constant dense<0.000000e+00> : vector<48x32xf32>
    %148 = tpu.matmul %147, %35, %cst_41 {dimension_numbers = #tpu.dot_dimension_numbers<[1], [0], [0], [1], [0, 0, 1, 1], [], []>} : vector<48x64xbf16>, vector<64x32xbf16>, vector<48x32xf32> -> vector<48x32xf32>
    %149 = arith.addf %115, %148 : vector<48x32xf32>
    %150 = vector.shape_cast %31 : vector<32xf32> to vector<1x32xf32>
    %151 = vector.broadcast %150 : vector<1x32xf32> to vector<48x32xf32>
    %152 = arith.addf %149, %151 : vector<48x32xf32>
    %c8 = arith.constant 8 : index
    %c0_42 = arith.constant 0 : index
    %153 = vector.load %arg1[%c8, %c0_42] : memref<18x128xf32, #tpu.memory_space<vmem>>, vector<1x32xf32>
    %154 = vector.shape_cast %153 : vector<1x32xf32> to vector<32xf32>
    %c9 = arith.constant 9 : index
    %c0_43 = arith.constant 0 : index
    %155 = vector.load %arg1[%c9, %c0_43] : memref<18x128xf32, #tpu.memory_space<vmem>>, vector<1x32xf32>
    %156 = vector.shape_cast %155 : vector<1x32xf32> to vector<32xf32>
    %c10 = arith.constant 10 : index
    %c0_44 = arith.constant 0 : index
    %157 = vector.load %arg1[%c10, %c0_44] : memref<18x128xf32, #tpu.memory_space<vmem>>, vector<1x96xf32>
    %158 = vector.shape_cast %157 : vector<1x96xf32> to vector<96xf32>
    %c11 = arith.constant 11 : index
    %c0_45 = arith.constant 0 : index
    %159 = vector.load %arg1[%c11, %c0_45] : memref<18x128xf32, #tpu.memory_space<vmem>>, vector<1x32xf32>
    %160 = vector.shape_cast %159 : vector<1x32xf32> to vector<32xf32>
    %c12 = arith.constant 12 : index
    %c0_46 = arith.constant 0 : index
    %161 = vector.load %arg1[%c12, %c0_46] : memref<18x128xf32, #tpu.memory_space<vmem>>, vector<1x32xf32>
    %162 = vector.shape_cast %161 : vector<1x32xf32> to vector<32xf32>
    %c13 = arith.constant 13 : index
    %c0_47 = arith.constant 0 : index
    %163 = vector.load %arg1[%c13, %c0_47] : memref<18x128xf32, #tpu.memory_space<vmem>>, vector<1x32xf32>
    %164 = vector.shape_cast %163 : vector<1x32xf32> to vector<32xf32>
    %c14 = arith.constant 14 : index
    %c0_48 = arith.constant 0 : index
    %165 = vector.load %arg1[%c14, %c0_48] : memref<18x128xf32, #tpu.memory_space<vmem>>, vector<1x64xf32>
    %166 = vector.shape_cast %165 : vector<1x64xf32> to vector<64xf32>
    %c15 = arith.constant 15 : index
    %c0_49 = arith.constant 0 : index
    %167 = vector.load %arg1[%c15, %c0_49] : memref<18x128xf32, #tpu.memory_space<vmem>>, vector<1x32xf32>
    %168 = vector.shape_cast %167 : vector<1x32xf32> to vector<32xf32>
    %c160 = arith.constant 160 : index
    %c0_50 = arith.constant 0 : index
    %169 = vector.load %arg2[%c160, %c0_50] : memref<352x128xbf16, #tpu.memory_space<vmem>>, vector<32x96xbf16>
    %c192 = arith.constant 192 : index
    %c0_51 = arith.constant 0 : index
    %170 = vector.load %arg2[%c192, %c0_51] : memref<352x128xbf16, #tpu.memory_space<vmem>>, vector<32x32xbf16>
    %c224 = arith.constant 224 : index
    %c0_52 = arith.constant 0 : index
    %171 = vector.load %arg2[%c224, %c0_52] : memref<352x128xbf16, #tpu.memory_space<vmem>>, vector<32x64xbf16>
    %c256 = arith.constant 256 : index
    %c0_53 = arith.constant 0 : index
    %172 = vector.load %arg2[%c256, %c0_53] : memref<352x128xbf16, #tpu.memory_space<vmem>>, vector<64x32xbf16>
    %cst_54 = arith.constant dense<0.000000e+00> : vector<48xf32>
    %173 = vector.multi_reduction <add>, %152, %cst_54 [1] : vector<48x32xf32> to vector<48xf32>
    %174 = vector.shape_cast %173 : vector<48xf32> to vector<48x1xf32>
    %cst_55 = arith.constant 3.200000e+01 : f32
    %175 = vector.broadcast %cst_55 : f32 to vector<48x1xf32>
    %176 = arith.divf %174, %175 : vector<48x1xf32>
    %177 = vector.broadcast %176 : vector<48x1xf32> to vector<48x32xf32>
    %178 = arith.subf %152, %177 : vector<48x32xf32>
    %179 = arith.mulf %178, %178 : vector<48x32xf32>
    %cst_56 = arith.constant dense<0.000000e+00> : vector<48xf32>
    %180 = vector.multi_reduction <add>, %179, %cst_56 [1] : vector<48x32xf32> to vector<48xf32>
    %181 = vector.shape_cast %180 : vector<48xf32> to vector<48x1xf32>
    %cst_57 = arith.constant 3.200000e+01 : f32
    %182 = vector.broadcast %cst_57 : f32 to vector<48x1xf32>
    %183 = arith.divf %181, %182 : vector<48x1xf32>
    %184 = vector.broadcast %176 : vector<48x1xf32> to vector<48x32xf32>
    %185 = arith.subf %152, %184 : vector<48x32xf32>
    %cst_58 = arith.constant 9.99999974E-6 : f32
    %186 = vector.broadcast %cst_58 : f32 to vector<48x1xf32>
    %187 = arith.addf %183, %186 : vector<48x1xf32>
    %188 = math.rsqrt %187 : vector<48x1xf32>
    %189 = vector.broadcast %188 : vector<48x1xf32> to vector<48x32xf32>
    %190 = arith.mulf %185, %189 : vector<48x32xf32>
    %191 = vector.shape_cast %154 : vector<32xf32> to vector<1x32xf32>
    %192 = vector.broadcast %191 : vector<1x32xf32> to vector<48x32xf32>
    %193 = arith.mulf %190, %192 : vector<48x32xf32>
    %194 = vector.shape_cast %156 : vector<32xf32> to vector<1x32xf32>
    %195 = vector.broadcast %194 : vector<1x32xf32> to vector<48x32xf32>
    %196 = arith.addf %193, %195 : vector<48x32xf32>
    %197 = arith.truncf %196 : vector<48x32xf32> to vector<48x32xbf16>
    %cst_59 = arith.constant dense<0.000000e+00> : vector<48x96xf32>
    %198 = tpu.matmul %197, %169, %cst_59 {dimension_numbers = #tpu.dot_dimension_numbers<[1], [0], [0], [1], [0, 0, 1, 1], [], []>} : vector<48x32xbf16>, vector<32x96xbf16>, vector<48x96xf32> -> vector<48x96xf32>
    %199 = vector.shape_cast %158 : vector<96xf32> to vector<1x96xf32>
    %200 = vector.broadcast %199 : vector<1x96xf32> to vector<48x96xf32>
    %201 = arith.addf %198, %200 : vector<48x96xf32>
    %202 = arith.truncf %201 : vector<48x96xf32> to vector<48x96xbf16>
    %203 = vector.extract_strided_slice %202 {offsets = [0, 0], sizes = [48, 32], strides = [1, 1]} : vector<48x96xbf16> to vector<48x32xbf16>
    %204 = vector.extract_strided_slice %202 {offsets = [0, 32], sizes = [48, 32], strides = [1, 1]} : vector<48x96xbf16> to vector<48x32xbf16>
    %205 = vector.extract_strided_slice %202 {offsets = [0, 64], sizes = [48, 32], strides = [1, 1]} : vector<48x96xbf16> to vector<48x32xbf16>
    %206 = vector.extract_strided_slice %203 {offsets = [0, 0], sizes = [48, 16], strides = [1, 1]} : vector<48x32xbf16> to vector<48x16xbf16>
    %207 = vector.extract_strided_slice %204 {offsets = [0, 0], sizes = [48, 16], strides = [1, 1]} : vector<48x32xbf16> to vector<48x16xbf16>
    %cst_60 = arith.constant dense<0.000000e+00> : vector<48x48xf32>
    %208 = tpu.matmul %206, %207, %cst_60 {dimension_numbers = #tpu.dot_dimension_numbers<[1], [1], [0], [0], [0, 0, 1, 0], [], []>} : vector<48x16xbf16>, vector<48x16xbf16>, vector<48x48xf32> -> vector<48x48xf32>
    %cst_61 = arith.constant 2.500000e-01 : f32
    %209 = vector.broadcast %cst_61 : f32 to vector<48x48xf32>
    %210 = arith.mulf %208, %209 : vector<48x48xf32>
    %cst_62 = arith.constant -1.000000e+09 : f32
    %211 = vector.broadcast %cst_62 : f32 to vector<48x48xf32>
    %212 = arith.select %15, %210, %211 : vector<48x48xi1>, vector<48x48xf32>
    %cst_63 = arith.constant dense<0xFF800000> : vector<48xf32>
    %213 = vector.multi_reduction <maximumf>, %212, %cst_63 [1] : vector<48x48xf32> to vector<48xf32>
    %214 = vector.shape_cast %213 : vector<48xf32> to vector<48x1xf32>
    %215 = vector.broadcast %214 : vector<48x1xf32> to vector<48x48xf32>
    %216 = arith.subf %212, %215 : vector<48x48xf32>
    %217 = math.exp %216 : vector<48x48xf32>
    %cst_64 = arith.constant dense<0.000000e+00> : vector<48xf32>
    %218 = vector.multi_reduction <add>, %217, %cst_64 [1] : vector<48x48xf32> to vector<48xf32>
    %219 = vector.shape_cast %218 : vector<48xf32> to vector<48x1xf32>
    %220 = tpu.reciprocal %219 {approx = true} : vector<48x1xf32> -> vector<48x1xf32>
    %221 = vector.broadcast %220 : vector<48x1xf32> to vector<48x48xf32>
    %222 = arith.mulf %217, %221 : vector<48x48xf32>
    %223 = arith.truncf %222 : vector<48x48xf32> to vector<48x48xbf16>
    %224 = vector.extract_strided_slice %205 {offsets = [0, 0], sizes = [48, 16], strides = [1, 1]} : vector<48x32xbf16> to vector<48x16xbf16>
    %cst_65 = arith.constant dense<0.000000e+00> : vector<48x16xf32>
    %225 = tpu.matmul %223, %224, %cst_65 {dimension_numbers = #tpu.dot_dimension_numbers<[1], [0], [0], [1], [0, 0, 1, 1], [], []>} : vector<48x48xbf16>, vector<48x16xbf16>, vector<48x16xf32> -> vector<48x16xf32>
    %226 = vector.extract_strided_slice %203 {offsets = [0, 16], sizes = [48, 16], strides = [1, 1]} : vector<48x32xbf16> to vector<48x16xbf16>
    %227 = vector.extract_strided_slice %204 {offsets = [0, 16], sizes = [48, 16], strides = [1, 1]} : vector<48x32xbf16> to vector<48x16xbf16>
    %cst_66 = arith.constant dense<0.000000e+00> : vector<48x48xf32>
    %228 = tpu.matmul %226, %227, %cst_66 {dimension_numbers = #tpu.dot_dimension_numbers<[1], [1], [0], [0], [0, 0, 1, 0], [], []>} : vector<48x16xbf16>, vector<48x16xbf16>, vector<48x48xf32> -> vector<48x48xf32>
    %cst_67 = arith.constant 2.500000e-01 : f32
    %229 = vector.broadcast %cst_67 : f32 to vector<48x48xf32>
    %230 = arith.mulf %228, %229 : vector<48x48xf32>
    %cst_68 = arith.constant -1.000000e+09 : f32
    %231 = vector.broadcast %cst_68 : f32 to vector<48x48xf32>
    %232 = arith.select %15, %230, %231 : vector<48x48xi1>, vector<48x48xf32>
    %cst_69 = arith.constant dense<0xFF800000> : vector<48xf32>
    %233 = vector.multi_reduction <maximumf>, %232, %cst_69 [1] : vector<48x48xf32> to vector<48xf32>
    %234 = vector.shape_cast %233 : vector<48xf32> to vector<48x1xf32>
    %235 = vector.broadcast %234 : vector<48x1xf32> to vector<48x48xf32>
    %236 = arith.subf %232, %235 : vector<48x48xf32>
    %237 = math.exp %236 : vector<48x48xf32>
    %cst_70 = arith.constant dense<0.000000e+00> : vector<48xf32>
    %238 = vector.multi_reduction <add>, %237, %cst_70 [1] : vector<48x48xf32> to vector<48xf32>
    %239 = vector.shape_cast %238 : vector<48xf32> to vector<48x1xf32>
    %240 = tpu.reciprocal %239 {approx = true} : vector<48x1xf32> -> vector<48x1xf32>
    %241 = vector.broadcast %240 : vector<48x1xf32> to vector<48x48xf32>
    %242 = arith.mulf %237, %241 : vector<48x48xf32>
    %243 = arith.truncf %242 : vector<48x48xf32> to vector<48x48xbf16>
    %244 = vector.extract_strided_slice %205 {offsets = [0, 16], sizes = [48, 16], strides = [1, 1]} : vector<48x32xbf16> to vector<48x16xbf16>
    %cst_71 = arith.constant dense<0.000000e+00> : vector<48x16xf32>
    %245 = tpu.matmul %243, %244, %cst_71 {dimension_numbers = #tpu.dot_dimension_numbers<[1], [0], [0], [1], [0, 0, 1, 1], [], []>} : vector<48x48xbf16>, vector<48x16xbf16>, vector<48x16xf32> -> vector<48x16xf32>
    %246 = tpu.concatenate %225, %245 in 1 : vector<48x16xf32>, vector<48x16xf32> -> vector<48x32xf32>
    %247 = arith.truncf %246 : vector<48x32xf32> to vector<48x32xbf16>
    %cst_72 = arith.constant dense<0.000000e+00> : vector<48x32xf32>
    %248 = tpu.matmul %247, %170, %cst_72 {dimension_numbers = #tpu.dot_dimension_numbers<[1], [0], [0], [1], [0, 0, 1, 1], [], []>} : vector<48x32xbf16>, vector<32x32xbf16>, vector<48x32xf32> -> vector<48x32xf32>
    %249 = arith.addf %152, %248 : vector<48x32xf32>
    %250 = vector.shape_cast %160 : vector<32xf32> to vector<1x32xf32>
    %251 = vector.broadcast %250 : vector<1x32xf32> to vector<48x32xf32>
    %252 = arith.addf %249, %251 : vector<48x32xf32>
    %cst_73 = arith.constant dense<0.000000e+00> : vector<48xf32>
    %253 = vector.multi_reduction <add>, %252, %cst_73 [1] : vector<48x32xf32> to vector<48xf32>
    %254 = vector.shape_cast %253 : vector<48xf32> to vector<48x1xf32>
    %cst_74 = arith.constant 3.200000e+01 : f32
    %255 = vector.broadcast %cst_74 : f32 to vector<48x1xf32>
    %256 = arith.divf %254, %255 : vector<48x1xf32>
    %257 = vector.broadcast %256 : vector<48x1xf32> to vector<48x32xf32>
    %258 = arith.subf %252, %257 : vector<48x32xf32>
    %259 = arith.mulf %258, %258 : vector<48x32xf32>
    %cst_75 = arith.constant dense<0.000000e+00> : vector<48xf32>
    %260 = vector.multi_reduction <add>, %259, %cst_75 [1] : vector<48x32xf32> to vector<48xf32>
    %261 = vector.shape_cast %260 : vector<48xf32> to vector<48x1xf32>
    %cst_76 = arith.constant 3.200000e+01 : f32
    %262 = vector.broadcast %cst_76 : f32 to vector<48x1xf32>
    %263 = arith.divf %261, %262 : vector<48x1xf32>
    %264 = vector.broadcast %256 : vector<48x1xf32> to vector<48x32xf32>
    %265 = arith.subf %252, %264 : vector<48x32xf32>
    %cst_77 = arith.constant 9.99999974E-6 : f32
    %266 = vector.broadcast %cst_77 : f32 to vector<48x1xf32>
    %267 = arith.addf %263, %266 : vector<48x1xf32>
    %268 = math.rsqrt %267 : vector<48x1xf32>
    %269 = vector.broadcast %268 : vector<48x1xf32> to vector<48x32xf32>
    %270 = arith.mulf %265, %269 : vector<48x32xf32>
    %271 = vector.shape_cast %162 : vector<32xf32> to vector<1x32xf32>
    %272 = vector.broadcast %271 : vector<1x32xf32> to vector<48x32xf32>
    %273 = arith.mulf %270, %272 : vector<48x32xf32>
    %274 = vector.shape_cast %164 : vector<32xf32> to vector<1x32xf32>
    %275 = vector.broadcast %274 : vector<1x32xf32> to vector<48x32xf32>
    %276 = arith.addf %273, %275 : vector<48x32xf32>
    %277 = arith.truncf %276 : vector<48x32xf32> to vector<48x32xbf16>
    %cst_78 = arith.constant dense<0.000000e+00> : vector<48x64xf32>
    %278 = tpu.matmul %277, %171, %cst_78 {dimension_numbers = #tpu.dot_dimension_numbers<[1], [0], [0], [1], [0, 0, 1, 1], [], []>} : vector<48x32xbf16>, vector<32x64xbf16>, vector<48x64xf32> -> vector<48x64xf32>
    %279 = vector.shape_cast %166 : vector<64xf32> to vector<1x64xf32>
    %280 = vector.broadcast %279 : vector<1x64xf32> to vector<48x64xf32>
    %281 = arith.addf %278, %280 : vector<48x64xf32>
    %cst_79 = arith.constant 0.000000e+00 : f32
    %282 = vector.broadcast %cst_79 : f32 to vector<48x64xf32>
    %283 = arith.maximumf %281, %282 : vector<48x64xf32>
    %284 = arith.truncf %283 : vector<48x64xf32> to vector<48x64xbf16>
    %cst_80 = arith.constant dense<0.000000e+00> : vector<48x32xf32>
    %285 = tpu.matmul %284, %172, %cst_80 {dimension_numbers = #tpu.dot_dimension_numbers<[1], [0], [0], [1], [0, 0, 1, 1], [], []>} : vector<48x64xbf16>, vector<64x32xbf16>, vector<48x32xf32> -> vector<48x32xf32>
    %286 = arith.addf %252, %285 : vector<48x32xf32>
    %287 = vector.shape_cast %168 : vector<32xf32> to vector<1x32xf32>
    %288 = vector.broadcast %287 : vector<1x32xf32> to vector<48x32xf32>
    %289 = arith.addf %286, %288 : vector<48x32xf32>
    %c0_81 = arith.constant 0 : index
    %c0_82 = arith.constant 0 : index
    %290 = vector.load %arg4[%c0_81, %c0_82] : memref<48x32xf32, #tpu.memory_space<vmem>>, vector<48x32xf32>
    tpu.vector_store %arg4[%c0_81, %c0_82], %289 {strides = array<i32>} : memref<48x32xf32, #tpu.memory_space<vmem>>, vector<48x32xf32>,
    %c2_83 = arith.constant 2 : index
    %c0_84 = arith.constant 0 : index
    %291 = tpu.strided_load %arg4[%c2_83, %c0_84] {strides = array<i32: 3, 1>} : memref<48x32xf32, #tpu.memory_space<vmem>>, vector<16x32xf32>
    %c16 = arith.constant 16 : index
    %c0_85 = arith.constant 0 : index
    %292 = vector.load %arg1[%c16, %c0_85] : memref<18x128xf32, #tpu.memory_space<vmem>>, vector<1x32xf32>
    %293 = vector.shape_cast %292 : vector<1x32xf32> to vector<32xf32>
    %c17 = arith.constant 17 : index
    %c0_86 = arith.constant 0 : index
    %294 = vector.load %arg1[%c17, %c0_86] : memref<18x128xf32, #tpu.memory_space<vmem>>, vector<1x32xf32>
    %295 = vector.shape_cast %294 : vector<1x32xf32> to vector<32xf32>
    %cst_87 = arith.constant dense<0.000000e+00> : vector<16xf32>
    %296 = vector.multi_reduction <add>, %291, %cst_87 [1] : vector<16x32xf32> to vector<16xf32>
    %297 = vector.shape_cast %296 : vector<16xf32> to vector<16x1xf32>
    %cst_88 = arith.constant 3.200000e+01 : f32
    %298 = vector.broadcast %cst_88 : f32 to vector<16x1xf32>
    %299 = arith.divf %297, %298 : vector<16x1xf32>
    %300 = vector.broadcast %299 : vector<16x1xf32> to vector<16x32xf32>
    %301 = arith.subf %291, %300 : vector<16x32xf32>
    %302 = arith.mulf %301, %301 : vector<16x32xf32>
    %cst_89 = arith.constant dense<0.000000e+00> : vector<16xf32>
    %303 = vector.multi_reduction <add>, %302, %cst_89 [1] : vector<16x32xf32> to vector<16xf32>
    %304 = vector.shape_cast %303 : vector<16xf32> to vector<16x1xf32>
    %cst_90 = arith.constant 3.200000e+01 : f32
    %305 = vector.broadcast %cst_90 : f32 to vector<16x1xf32>
    %306 = arith.divf %304, %305 : vector<16x1xf32>
    %307 = vector.broadcast %299 : vector<16x1xf32> to vector<16x32xf32>
    %308 = arith.subf %291, %307 : vector<16x32xf32>
    %cst_91 = arith.constant 9.99999974E-6 : f32
    %309 = vector.broadcast %cst_91 : f32 to vector<16x1xf32>
    %310 = arith.addf %306, %309 : vector<16x1xf32>
    %311 = math.rsqrt %310 : vector<16x1xf32>
    %312 = vector.broadcast %311 : vector<16x1xf32> to vector<16x32xf32>
    %313 = arith.mulf %308, %312 : vector<16x32xf32>
    %314 = vector.shape_cast %293 : vector<32xf32> to vector<1x32xf32>
    %315 = vector.broadcast %314 : vector<1x32xf32> to vector<16x32xf32>
    %316 = arith.mulf %313, %315 : vector<16x32xf32>
    %317 = vector.shape_cast %295 : vector<32xf32> to vector<1x32xf32>
    %318 = vector.broadcast %317 : vector<1x32xf32> to vector<16x32xf32>
    %319 = arith.addf %316, %318 : vector<16x32xf32>
    %c320 = arith.constant 320 : index
    %c0_92 = arith.constant 0 : index
    %320 = vector.load %arg2[%c320, %c0_92] : memref<352x128xbf16, #tpu.memory_space<vmem>>, vector<32x128xbf16>
    %321 = arith.truncf %319 : vector<16x32xf32> to vector<16x32xbf16>
    %cst_93 = arith.constant dense<0.000000e+00> : vector<16x128xf32>
    %322 = tpu.matmul %321, %320, %cst_93 {dimension_numbers = #tpu.dot_dimension_numbers<[1], [0], [0], [1], [0, 0, 1, 1], [], []>} : vector<16x32xbf16>, vector<32x128xbf16>, vector<16x128xf32> -> vector<16x128xf32>
    %c0_94 = arith.constant 0 : index
    %c0_95 = arith.constant 0 : index
    %323 = vector.load %arg3[%c0_94, %c0_95] : memref<16x128xf32, #tpu.memory_space<vmem>>, vector<16x128xf32>
    tpu.vector_store %arg3[%c0_94, %c0_95], %322 {strides = array<i32>} : memref<16x128xf32, #tpu.memory_space<vmem>>, vector<16x128xf32>,
    return
  }
}

</mosaic_0001>

<llo_original>
// kernel: decision_transformer_forward.1
$region0: #{decision_transformer_forward.1}
  #allocation0 [shape = 'u32[]', space=smem, size = 0x4, offset = 0x4, fixed_abs, tag = 'smem constant byte address 0x4 - core index']
  #allocation1 [shape = 'u32[72,128]{1,0:T(1,128)}', space=vmem, size = 0x9000, scoped, tag = 'internal scratch']
  #allocation2 [shape = 'f32[48,32]{1,0:T(8,128)}', space=vmem, size = 0x6000, scoped, tag = 'scratch operand']
  %s0 = inlined_call_operand.vmem [shape: f32[48,32], index: 0, kind: input, shape index: {}]
  %s1 = inlined_call_operand.vmem [shape: f32[18,128], index: 1, kind: input, shape index: {}]
  %s2 = inlined_call_operand.vmem [shape: bf16[352,128], index: 2, kind: input, shape index: {}]
  %s3 = inlined_call_operand.vmem [shape: f32[16,128], index: 3, kind: output, shape index: {}]
  %s4 = sld [smem:[#allocation0]]
  $region22: #{decision_transformer_forward.1} parent=0
    _
  %s6 = ssub.s32 1, %s4
  %s7 = scalar_select 0, %s6, %s4
  // Predicated region
  $region2: #{decision_transformer_forward.1} parent=0 // pred_check
    _
  $region3: #{decision_transformer_forward.1} parent=0 // pred_check_branch
    %9 = sbr.rel (0) target = $region5
  $region4: #{decision_transformer_forward.1} parent=0 // pred_region
    _
  $region5: #{decision_transformer_forward.1} parent=0 // pred_fallthru
    _
  // Predicated region
  $region6: #{decision_transformer_forward.1} parent=0 // pred_check
    _
  $region7: #{decision_transformer_forward.1} parent=0 // pred_check_branch
    %11 = sbr.rel (0) target = $region9
  $region8: #{decision_transformer_forward.1} parent=0 // pred_region
    _
  $region9: #{decision_transformer_forward.1} parent=0 // pred_fallthru
    _
  // Predicated region
  $region10: #{decision_transformer_forward.1} parent=0 // pred_check
    _
  $region11: #{decision_transformer_forward.1} parent=0 // pred_check_branch
    %13 = sbr.rel (0) target = $region13
  $region12: #{decision_transformer_forward.1} parent=0 // pred_region
    _
  $region13: #{decision_transformer_forward.1} parent=0 // pred_fallthru
    _
  %v15 = vld [vmem:[%s0] sm:$0xff]
  %v16 = vld [vmem:[%s0 + $0x8] sm:$0xff]
  %v17 = vld [vmem:[%s0 + $0x10] sm:$0xff]
  %v18 = vld [vmem:[%s0 + $0x18] sm:$0xff]
  %v19 = vld [vmem:[%s0 + $0x20] sm:$0xff]
  %v20 = vld [vmem:[%s0 + $0x28] sm:$0xff]
  %v21 = vlaneseq
  %v22 = vshrl.u32 %v21, 7
  %v23 = vadd.s32 %v22, 8
  %v24 = vadd.s32 %v22, 16
  %v25 = vadd.s32 %v22, 24
  %v26 = vadd.s32 %v22, 32
  %v27 = vadd.s32 %v22, 40
  %v28 = vlaneseq
  %v29 = vand.u32 %v28, 127
  %vm30 = vcmp.le.s32.totalorder %v29, %v22
  %vm31 = vcmp.le.s32.totalorder %v29, %v23
  %vm32 = vcmp.le.s32.totalorder %v29, %v24
  %vm33 = vcmp.le.s32.totalorder %v29, %v25
  %vm34 = vcmp.le.s32.totalorder %v29, %v26
  %vm35 = vcmp.le.s32.totalorder %v29, %v27
  %vm36 = vcmp.ge.s32.totalorder %v29, 0
  %vm37 = vcmp.lt.s32.totalorder %v22, 24
  %vm38 = vcmp.lt.s32.totalorder %v23, 24
  %vm39 = vcmp.lt.s32.totalorder %v24, 24
  %vm40 = vcmp.lt.s32.totalorder %v25, 24
  %vm41 = vcmp.lt.s32.totalorder %v26, 24
  %vm42 = vcmp.lt.s32.totalorder %v27, 24
  %vm43 = vmand %vm36, %vm37
  %vm44 = vmand %vm36, %vm38
  %vm45 = vmand %vm36, %vm39
  %vm46 = vmand %vm36, %vm40
  %vm47 = vmand %vm36, %vm41
  %vm48 = vmand %vm36, %vm42
  %vm49 = vcmp.ge.s32.totalorder %v29, 24
  %vm50 = vcmp.lt.s32.totalorder %v22, 48
  %vm51 = vcmp.lt.s32.totalorder %v23, 48
  %vm52 = vcmp.lt.s32.totalorder %v24, 48
  %vm53 = vcmp.lt.s32.totalorder %v25, 48
  %vm54 = vcmp.lt.s32.totalorder %v26, 48
  %vm55 = vcmp.lt.s32.totalorder %v27, 48
  %vm56 = vmand %vm49, %vm50
  %vm57 = vmand %vm49, %vm51
  %vm58 = vmand %vm49, %vm52
  %vm59 = vmand %vm49, %vm53
  %vm60 = vmand %vm49, %vm54
  %vm61 = vmand %vm49, %vm55
  %vm62 = vmor %vm43, %vm56
  %vm63 = vmor %vm44, %vm57
  %vm64 = vmor %vm45, %vm58
  %vm65 = vmor %vm46, %vm59
  %vm66 = vmor %vm47, %vm60
  %vm67 = vmor %vm48, %vm61
  %vm68 = vmand %vm62, %vm30
  %vm69 = vmand %vm63, %vm31
  %vm70 = vmand %vm64, %vm32
  %vm71 = vmand %vm65, %vm33
  %vm72 = vmand %vm66, %vm34
  %vm73 = vmand %vm67, %vm35
  %v74 = vld [vmem:[%s1] sm:$0x1]
  %v75 = vld [vmem:[%s1 + $0x1] sm:$0x1]
  %v76 = vld [vmem:[%s1 + $0x2] sm:$0x1]
  %v77 = vld [vmem:[%s1 + $0x3] sm:$0x1]
  %v78 = vld [vmem:[%s1 + $0x4] sm:$0x1]
  %v79 = vld [vmem:[%s1 + $0x5] sm:$0x1]
  %v80 = vld [vmem:[%s1 + $0x6] sm:$0x1]
  %v81 = vld [vmem:[%s1 + $0x7] sm:$0x1]
  %v82 = vld [vmem:[%s2] sm:$0xf]
  %v83 = vld [vmem:[%s2 + $0x4] sm:$0xf]
  %v84 = vld [vmem:[%s2 + $0x8] sm:$0xf]
  %v85 = vld [vmem:[%s2 + $0xc] sm:$0xf]
  %v86 = vld [vmem:[%s2 + $0x10] sm:$0xf]
  %v87 = vld [vmem:[%s2 + $0x14] sm:$0xf]
  %v88 = vld [vmem:[%s2 + $0x18] sm:$0xf]
  %v89 = vld [vmem:[%s2 + $0x1c] sm:$0xf]
  %v90 = vld [vmem:[%s2 + $0x20] sm:$0xf]
  %v91 = vld [vmem:[%s2 + $0x24] sm:$0xf]
  %v92 = vld [vmem:[%s2 + $0x28] sm:$0xf]
  %v93 = vld [vmem:[%s2 + $0x2c] sm:$0xf]
  %v94 = vld [vmem:[%s2 + $0x30] sm:$0xf]
  %v95 = vld [vmem:[%s2 + $0x34] sm:$0xf]
  %v96 = vld [vmem:[%s2 + $0x38] sm:$0xf]
  %v97 = vld [vmem:[%s2 + $0x3c] sm:$0xf]
  %v98 = vld [vmem:[%s2 + $0x40] sm:$0xf]
  %v99 = vld [vmem:[%s2 + $0x44] sm:$0xf]
  %v100 = vld [vmem:[%s2 + $0x48] sm:$0xf]
  %v101 = vld [vmem:[%s2 + $0x4c] sm:$0xf]
  %vm102 = vcmask 261120
  %v103 = vsel %vm102, %v15, 0.0
  %104 = vadd.xlane.f32.xlu0 %v103
  %v105 = vpop.xlane.xlu0 %104
  %v106 = vsel %vm102, %v16, 0.0
  %107 = vadd.xlane.f32.xlu0 %v106
  %v108 = vpop.xlane.xlu0 %107
  %v109 = vsel %vm102, %v17, 0.0
  %110 = vadd.xlane.f32.xlu0 %v109
  %v111 = vpop.xlane.xlu0 %110
  %v112 = vsel %vm102, %v18, 0.0
  %113 = vadd.xlane.f32.xlu0 %v112
  %v114 = vpop.xlane.xlu0 %113
  %v115 = vsel %vm102, %v19, 0.0
  %116 = vadd.xlane.f32.xlu0 %v115
  %v117 = vpop.xlane.xlu0 %116
  %v118 = vsel %vm102, %v20, 0.0
  %119 = vadd.xlane.f32.xlu0 %v118
  %v120 = vpop.xlane.xlu0 %119
  %v121 = vrcp.pop 32.0
  %v122 = vmul.f32 32.0, %v121
  %v123 = vsub.f32 1.0, %v122
  %v124 = vmul.f32 %v121, %v123
  %v125 = vadd.f32 %v121, %v124
  %vm126 = vweird.f32 %v121
  %v127 = vsel %vm126, %v121, %v125
  %v128 = vmul.f32 %v105, %v127
  %v129 = vmul.f32 %v108, %v127
  %v130 = vmul.f32 %v111, %v127
  %v131 = vmul.f32 %v114, %v127
  %v132 = vmul.f32 %v117, %v127
  %v133 = vmul.f32 %v120, %v127
  %v134 = vsub.f32 %v15, %v128
  %v135 = vsub.f32 %v16, %v129
  %v136 = vsub.f32 %v17, %v130
  %v137 = vsub.f32 %v18, %v131
  %v138 = vsub.f32 %v19, %v132
  %v139 = vsub.f32 %v20, %v133
  %v140 = vmul.f32 %v134, %v134
  %v141 = vmul.f32 %v135, %v135
  %v142 = vmul.f32 %v136, %v136
  %v143 = vmul.f32 %v137, %v137
  %v144 = vmul.f32 %v138, %v138
  %v145 = vmul.f32 %v139, %v139
  %v146 = vsel %vm102, %v140, 0.0
  %147 = vadd.xlane.f32.xlu0 %v146
  %v148 = vpop.xlane.xlu0 %147
  %v149 = vsel %vm102, %v141, 0.0
  %150 = vadd.xlane.f32.xlu0 %v149
  %v151 = vpop.xlane.xlu0 %150
  %v152 = vsel %vm102, %v142, 0.0
  %153 = vadd.xlane.f32.xlu0 %v152
  %v154 = vpop.xlane.xlu0 %153
  %v155 = vsel %vm102, %v143, 0.0
  %156 = vadd.xlane.f32.xlu0 %v155
  %v157 = vpop.xlane.xlu0 %156
  %v158 = vsel %vm102, %v144, 0.0
  %159 = vadd.xlane.f32.xlu0 %v158
  %v160 = vpop.xlane.xlu0 %159
  %v161 = vsel %vm102, %v145, 0.0
  %162 = vadd.xlane.f32.xlu0 %v161
  %v163 = vpop.xlane.xlu0 %162
  %v164 = vmul.f32 %v148, %v127
  %v165 = vmul.f32 %v151, %v127
  %v166 = vmul.f32 %v154, %v127
  %v167 = vmul.f32 %v157, %v127
  %v168 = vmul.f32 %v160, %v127
  %v169 = vmul.f32 %v163, %v127
  %v170 = vadd.f32 %v164, 1e-05
  %v171 = vadd.f32 %v165, 1e-05
  %v172 = vadd.f32 %v166, 1e-05
  %v173 = vadd.f32 %v167, 1e-05
  %v174 = vadd.f32 %v168, 1e-05
  %v175 = vadd.f32 %v169, 1e-05
  %v176 = vrsqrt.pop %v170
  %v177 = vmul.f32 %v176, %v170
  %v178 = vmul.f32 %v177, %v176
  %v179 = vmul.f32 0.5, %v178
  %v180 = vsub.f32 1.5, %v179
  %v181 = vmul.f32 %v176, %v180
  %vm182 = vweird.f32 %v170
  %vm183 = vweird.f32 %v176
  %vm184 = vmor %vm182, %vm183
  %v185 = vsel %vm184, %v176, %v181
  %v186 = vrsqrt.pop %v171
  %v187 = vmul.f32 %v186, %v171
  %v188 = vmul.f32 %v187, %v186
  %v189 = vmul.f32 0.5, %v188
  %v190 = vsub.f32 1.5, %v189
  %v191 = vmul.f32 %v186, %v190
  %vm192 = vweird.f32 %v171
  %vm193 = vweird.f32 %v186
  %vm194 = vmor %vm192, %vm193
  %v195 = vsel %vm194, %v186, %v191
  %v196 = vrsqrt.pop %v172
  %v197 = vmul.f32 %v196, %v172
  %v198 = vmul.f32 %v197, %v196
  %v199 = vmul.f32 0.5, %v198
  %v200 = vsub.f32 1.5, %v199
  %v201 = vmul.f32 %v196, %v200
  %vm202 = vweird.f32 %v172
  %vm203 = vweird.f32 %v196
  %vm204 = vmor %vm202, %vm203
  %v205 = vsel %vm204, %v196, %v201
  %v206 = vrsqrt.pop %v173
  %v207 = vmul.f32 %v206, %v173
  %v208 = vmul.f32 %v207, %v206
  %v209 = vmul.f32 0.5, %v208
  %v210 = vsub.f32 1.5, %v209
  %v211 = vmul.f32 %v206, %v210
  %vm212 = vweird.f32 %v173
  %vm213 = vweird.f32 %v206
  %vm214 = vmor %vm212, %vm213
  %v215 = vsel %vm214, %v206, %v211
  %v216 = vrsqrt.pop %v174
  %v217 = vmul.f32 %v216, %v174
  %v218 = vmul.f32 %v217, %v216
  %v219 = vmul.f32 0.5, %v218
  %v220 = vsub.f32 1.5, %v219
  %v221 = vmul.f32 %v216, %v220
  %vm222 = vweird.f32 %v174
  %vm223 = vweird.f32 %v216
  %vm224 = vmor %vm222, %vm223
  %v225 = vsel %vm224, %v216, %v221
  %v226 = vrsqrt.pop %v175
  %v227 = vmul.f32 %v226, %v175
  %v228 = vmul.f32 %v227, %v226
  %v229 = vmul.f32 0.5, %v228
  %v230 = vsub.f32 1.5, %v229
  %v231 = vmul.f32 %v226, %v230
  %vm232 = vweird.f32 %v175
  %vm233 = vweird.f32 %v226
  %vm234 = vmor %vm232, %vm233
  %v235 = vsel %vm234, %v226, %v231
  %v236 = vmul.f32 %v134, %v185
  %v237 = vmul.f32 %v135, %v195
  %v238 = vmul.f32 %v136, %v205
  %v239 = vmul.f32 %v137, %v215
  %v240 = vmul.f32 %v138, %v225
  %v241 = vmul.f32 %v139, %v235
  %v242 = vperm.slane %v74, 0
  %v243 = vmul.f32 %v236, %v242
  %v244 = vmul.f32 %v237, %v242
  %v245 = vmul.f32 %v238, %v242
  %v246 = vmul.f32 %v239, %v242
  %v247 = vmul.f32 %v240, %v242
  %v248 = vmul.f32 %v241, %v242
  %v249 = vperm.slane %v75, 0
  %v250 = vadd.f32 %v243, %v249
  %v251 = vadd.f32 %v244, %v249
  %v252 = vadd.f32 %v245, %v249
  %v253 = vadd.f32 %v246, %v249
  %v254 = vadd.f32 %v247, %v249
  %v255 = vadd.f32 %v248, %v249
  %v256 = vpack.c.bf16 %v251, %v250
  %v257 = vpack.c.bf16 %v253, %v252
  %v258 = vpack.c.bf16 %v255, %v254
  %v259 = vperm.slane %v76, 0
  %v264 = vunpack.c.l.b16 %v82
  %v265 = vunpack.c.l.b16 %v83
  %v266 = vunpack.c.l.b16 %v84
  %v267 = vunpack.c.l.b16 %v85
  %v268 = vpack.c.b16 %v265, %v264
  %v269 = vpack.c.b16 %v267, %v266
  %v273 = vsel %vm102, %v256, 0
  %v276 = vsel %vm102, %v257, 0
  %v279 = vsel %vm102, %v258, 0
  %281 = vmatpush.bf16.msra.mxu0 0
  %282 = vmatpush.bf16.msra.mxu0 0
  %283 = vmatpush.bf16.msra.mxu0 0
  %284 = vmatpush.bf16.msra.mxu0 0
  %285 = vmatpush.bf16.msra.mxu0 0
  %286 = vmatpush.bf16.msra.mxu0 0
  %287 = vmatpush.bf16.msra.mxu0 %v269
  %288 = vmatpush.bf16.msra.mxu0 %v268
  %289 = vmatmul.bf16.gmra.mxu0 %v273
  %v290 = vpop.f32.mrf.mxu0
  %v291 = vadd.f32 %v259, %v290
  %v292 = vpop.f32.mrf.mxu0
  %v293 = vadd.f32 %v259, %v292
  %294 = vmatmul.bf16.gmra.mxu0 %v276
  %v295 = vpop.f32.mrf.mxu0
  %v296 = vadd.f32 %v259, %v295
  %v297 = vpop.f32.mrf.mxu0
  %v298 = vadd.f32 %v259, %v297
  %299 = vmatmul.bf16.gmra.mxu0 %v279
  %v300 = vpop.f32.mrf.mxu0
  %v301 = vadd.f32 %v259, %v300
  %v302 = vpop.f32.mrf.mxu0
  %v303 = vadd.f32 %v259, %v302
  %304 = vdwg.mxu0
  %v305 = vpack.c.bf16 %v291, %v291
  %v306 = vpack.c.bf16 %v293, %v293
  %v307 = vpack.c.bf16 %v296, %v296
  %v308 = vpack.c.bf16 %v298, %v298
  %v309 = vpack.c.bf16 %v301, %v301
  %v310 = vpack.c.bf16 %v303, %v303
  %v317 = vunpack.c.l.b16 %v305
  %v318 = vunpack.c.l.b16 %v306
  %v319 = vunpack.c.l.b16 %v307
  %v320 = vunpack.c.l.b16 %v308
  %v321 = vunpack.c.l.b16 %v309
  %v322 = vunpack.c.l.b16 %v310
  %v323 = vpack.c.b16 %v318, %v317
  %v324 = vpack.c.b16 %v320, %v319
  %v325 = vpack.c.b16 %v322, %v321
  %326 = vrot.lane.b32.xlu0 %v323, 96
  %v327 = vpop.permute.xlu0 %326
  %328 = vrot.lane.b32.xlu0 %v324, 96
  %v329 = vpop.permute.xlu0 %328
  %330 = vrot.lane.b32.xlu0 %v325, 96
  %v331 = vpop.permute.xlu0 %330
  %vm332 = vcmask 130048
  %v334 = vsel %vm332, %v323, 0
  %v337 = vsel %vm332, %v324, 0
  %v340 = vsel %vm332, %v325, 0
  %v343 = vsel %vm332, %v327, 0
  %v346 = vsel %vm332, %v329, 0
  %v349 = vsel %vm332, %v331, 0
  %351 = vmatpush.bf16.xpose.msra.mxu0 0
  %352 = vmatpush.bf16.xpose.msra.mxu0 0
  %353 = vmatpush.bf16.xpose.msra.mxu0 0
  %354 = vmatpush.bf16.xpose.msra.mxu0 0
  %355 = vmatpush.bf16.xpose.msra.mxu0 0
  %356 = vmatpush.bf16.xpose.msra.mxu0 %v349
  %357 = vmatpush.bf16.xpose.msra.mxu0 %v346
  %358 = vmatpush.bf16.xpose.msra.mxu0 %v343
  %359 = vmatmul.bf16.gmra.mxu0 %v334
  %v360 = vpop.f32.mrf.mxu0
  %v361 = vadd.f32 0.0, %v360
  %v362 = vpop.f32.mrf.mxu0
  %v363 = vadd.f32 0.0, %v362
  %364 = vmatmul.bf16.gmra.mxu0 %v337
  %v365 = vpop.f32.mrf.mxu0
  %v366 = vadd.f32 0.0, %v365
  %v367 = vpop.f32.mrf.mxu0
  %v368 = vadd.f32 0.0, %v367
  %369 = vmatmul.bf16.gmra.mxu0 %v340
  %v370 = vpop.f32.mrf.mxu0
  %v371 = vadd.f32 0.0, %v370
  %v372 = vpop.f32.mrf.mxu0
  %v373 = vadd.f32 0.0, %v372
  %374 = vdwg.mxu0
  %v375 = vmul.f32 %v361, 0.25
  %v376 = vmul.f32 %v363, 0.25
  %v377 = vmul.f32 %v366, 0.25
  %v378 = vmul.f32 %v368, 0.25
  %v379 = vmul.f32 %v371, 0.25
  %v380 = vmul.f32 %v373, 0.25
  %v381 = vsel %vm68, %v375, -1e+09
  %v382 = vsel %vm69, %v376, -1e+09
  %v383 = vsel %vm70, %v377, -1e+09
  %v384 = vsel %vm71, %v378, -1e+09
  %v385 = vsel %vm72, %v379, -1e+09
  %v386 = vsel %vm73, %v380, -1e+09
  %vm387 = vcmask 392192
  %v388 = vsel %vm387, %v381, -inf
  %389 = vmax.xlane.f32.xlu0 %v388
  %v390 = vpop.xlane.xlu0 %389
  %v391 = vsel %vm387, %v382, -inf
  %392 = vmax.xlane.f32.xlu0 %v391
  %v393 = vpop.xlane.xlu0 %392
  %v394 = vsel %vm387, %v383, -inf
  %395 = vmax.xlane.f32.xlu0 %v394
  %v396 = vpop.xlane.xlu0 %395
  %v397 = vsel %vm387, %v384, -inf
  %398 = vmax.xlane.f32.xlu0 %v397
  %v399 = vpop.xlane.xlu0 %398
  %v400 = vsel %vm387, %v385, -inf
  %401 = vmax.xlane.f32.xlu0 %v400
  %v402 = vpop.xlane.xlu0 %401
  %v403 = vsel %vm387, %v386, -inf
  %404 = vmax.xlane.f32.xlu0 %v403
  %v405 = vpop.xlane.xlu0 %404
  %v406 = vsub.f32 %v381, %v390
  %v407 = vsub.f32 %v382, %v393
  %v408 = vsub.f32 %v383, %v396
  %v409 = vsub.f32 %v384, %v399
  %v410 = vsub.f32 %v385, %v402
  %v411 = vsub.f32 %v386, %v405
  %v412 = vmul.f32 %v406, 1.442695
  %v413 = vpow.pop %v412
  %v414 = vmul.f32 %v407, 1.442695
  %v415 = vpow.pop %v414
  %v416 = vmul.f32 %v408, 1.442695
  %v417 = vpow.pop %v416
  %v418 = vmul.f32 %v409, 1.442695
  %v419 = vpow.pop %v418
  %v420 = vmul.f32 %v410, 1.442695
  %v421 = vpow.pop %v420
  %v422 = vmul.f32 %v411, 1.442695
  %v423 = vpow.pop %v422
  %v424 = vsel %vm387, %v413, 0.0
  %425 = vadd.xlane.f32.xlu0 %v424
  %v426 = vpop.xlane.xlu0 %425
  %v427 = vsel %vm387, %v415, 0.0
  %428 = vadd.xlane.f32.xlu0 %v427
  %v429 = vpop.xlane.xlu0 %428
  %v430 = vsel %vm387, %v417, 0.0
  %431 = vadd.xlane.f32.xlu0 %v430
  %v432 = vpop.xlane.xlu0 %431
  %v433 = vsel %vm387, %v419, 0.0
  %434 = vadd.xlane.f32.xlu0 %v433
  %v435 = vpop.xlane.xlu0 %434
  %v436 = vsel %vm387, %v421, 0.0
  %437 = vadd.xlane.f32.xlu0 %v436
  %v438 = vpop.xlane.xlu0 %437
  %v439 = vsel %vm387, %v423, 0.0
  %440 = vadd.xlane.f32.xlu0 %v439
  %v441 = vpop.xlane.xlu0 %440
  %v442 = vrcp.pop %v426
  %v443 = vrcp.pop %v429
  %v444 = vrcp.pop %v432
  %v445 = vrcp.pop %v435
  %v446 = vrcp.pop %v438
  %v447 = vrcp.pop %v441
  %v448 = vmul.f32 %v413, %v442
  %v449 = vmul.f32 %v415, %v443
  %v450 = vmul.f32 %v417, %v444
  %v451 = vmul.f32 %v419, %v445
  %v452 = vmul.f32 %v421, %v446
  %v453 = vmul.f32 %v423, %v447
  %v454 = vpack.c.bf16 %v449, %v448
  %v455 = vpack.c.bf16 %v451, %v450
  %v456 = vpack.c.bf16 %v453, %v452
  %457 = vrot.lane.b32.xlu0 %v323, 64
  %v458 = vpop.permute.xlu0 %457
  %459 = vrot.lane.b32.xlu0 %v324, 64
  %v460 = vpop.permute.xlu0 %459
  %461 = vrot.lane.b32.xlu0 %v325, 64
  %v462 = vpop.permute.xlu0 %461
  %v467 = vsel %vm387, %v454, 0
  %v470 = vsel %vm387, %v455, 0
  %v473 = vsel %vm387, %v456, 0
  %475 = vmatpush.bf16.msra.mxu0 0
  %476 = vmatpush.bf16.msra.mxu0 0
  %477 = vmatpush.bf16.msra.mxu0 0
  %478 = vmatpush.bf16.msra.mxu0 0
  %479 = vmatpush.bf16.msra.mxu0 0
  %480 = vmatpush.bf16.msra.mxu0 %v462
  %481 = vmatpush.bf16.msra.mxu0 %v460
  %482 = vmatpush.bf16.msra.mxu0 %v458
  %483 = vmatmul.bf16.gmra.mxu0 %v467
  %v484 = vpop.f32.mrf.mxu0
  %v485 = vadd.f32 0.0, %v484
  %v486 = vpop.f32.mrf.mxu0
  %v487 = vadd.f32 0.0, %v486
  %488 = vmatmul.bf16.gmra.mxu0 %v470
  %v489 = vpop.f32.mrf.mxu0
  %v490 = vadd.f32 0.0, %v489
  %v491 = vpop.f32.mrf.mxu0
  %v492 = vadd.f32 0.0, %v491
  %493 = vmatmul.bf16.gmra.mxu0 %v473
  %v494 = vpop.f32.mrf.mxu0
  %v495 = vadd.f32 0.0, %v494
  %v496 = vpop.f32.mrf.mxu0
  %v497 = vadd.f32 0.0, %v496
  %498 = vdwg.mxu0
  %499 = vrot.lane.b32.xlu0 %v323, 112
  %v500 = vpop.permute.xlu0 %499
  %501 = vrot.lane.b32.xlu0 %v324, 112
  %v502 = vpop.permute.xlu0 %501
  %503 = vrot.lane.b32.xlu0 %v325, 112
  %v504 = vpop.permute.xlu0 %503
  %505 = vrot.lane.b32.xlu0 %v323, 80
  %v506 = vpop.permute.xlu0 %505
  %507 = vrot.lane.b32.xlu0 %v324, 80
  %v508 = vpop.permute.xlu0 %507
  %509 = vrot.lane.b32.xlu0 %v325, 80
  %v510 = vpop.permute.xlu0 %509
  %v512 = vsel %vm332, %v500, 0
  %v515 = vsel %vm332, %v502, 0
  %v518 = vsel %vm332, %v504, 0
  %v521 = vsel %vm332, %v506, 0
  %v524 = vsel %vm332, %v508, 0
  %v527 = vsel %vm332, %v510, 0
  %529 = vmatpush.bf16.xpose.msra.mxu0 0
  %530 = vmatpush.bf16.xpose.msra.mxu0 0
  %531 = vmatpush.bf16.xpose.msra.mxu0 0
  %532 = vmatpush.bf16.xpose.msra.mxu0 0
  %533 = vmatpush.bf16.xpose.msra.mxu0 0
  %534 = vmatpush.bf16.xpose.msra.mxu0 %v527
  %535 = vmatpush.bf16.xpose.msra.mxu0 %v524
  %536 = vmatpush.bf16.xpose.msra.mxu0 %v521
  %537 = vmatmul.bf16.gmra.mxu0 %v512
  %v538 = vpop.f32.mrf.mxu0
  %v539 = vadd.f32 0.0, %v538
  %v540 = vpop.f32.mrf.mxu0
  %v541 = vadd.f32 0.0, %v540
  %542 = vmatmul.bf16.gmra.mxu0 %v515
  %v543 = vpop.f32.mrf.mxu0
  %v544 = vadd.f32 0.0, %v543
  %v545 = vpop.f32.mrf.mxu0
  %v546 = vadd.f32 0.0, %v545
  %547 = vmatmul.bf16.gmra.mxu0 %v518
  %v548 = vpop.f32.mrf.mxu0
  %v549 = vadd.f32 0.0, %v548
  %v550 = vpop.f32.mrf.mxu0
  %v551 = vadd.f32 0.0, %v550
  %552 = vdwg.mxu0
  %v553 = vmul.f32 %v539, 0.25
  %v554 = vmul.f32 %v541, 0.25
  %v555 = vmul.f32 %v544, 0.25
  %v556 = vmul.f32 %v546, 0.25
  %v557 = vmul.f32 %v549, 0.25
  %v558 = vmul.f32 %v551, 0.25
  %v559 = vsel %vm68, %v553, -1e+09
  %v560 = vsel %vm69, %v554, -1e+09
  %v561 = vsel %vm70, %v555, -1e+09
  %v562 = vsel %vm71, %v556, -1e+09
  %v563 = vsel %vm72, %v557, -1e+09
  %v564 = vsel %vm73, %v558, -1e+09
  %v565 = vsel %vm387, %v559, -inf
  %566 = vmax.xlane.f32.xlu0 %v565
  %v567 = vpop.xlane.xlu0 %566
  %v568 = vsel %vm387, %v560, -inf
  %569 = vmax.xlane.f32.xlu0 %v568
  %v570 = vpop.xlane.xlu0 %569
  %v571 = vsel %vm387, %v561, -inf
  %572 = vmax.xlane.f32.xlu0 %v571
  %v573 = vpop.xlane.xlu0 %572
  %v574 = vsel %vm387, %v562, -inf
  %575 = vmax.xlane.f32.xlu0 %v574
  %v576 = vpop.xlane.xlu0 %575
  %v577 = vsel %vm387, %v563, -inf
  %578 = vmax.xlane.f32.xlu0 %v577
  %v579 = vpop.xlane.xlu0 %578
  %v580 = vsel %vm387, %v564, -inf
  %581 = vmax.xlane.f32.xlu0 %v580
  %v582 = vpop.xlane.xlu0 %581
  %v583 = vsub.f32 %v559, %v567
  %v584 = vsub.f32 %v560, %v570
  %v585 = vsub.f32 %v561, %v573
  %v586 = vsub.f32 %v562, %v576
  %v587 = vsub.f32 %v563, %v579
  %v588 = vsub.f32 %v564, %v582
  %v589 = vmul.f32 %v583, 1.442695
  %v590 = vpow.pop %v589
  %v591 = vmul.f32 %v584, 1.442695
  %v592 = vpow.pop %v591
  %v593 = vmul.f32 %v585, 1.442695
  %v594 = vpow.pop %v593
  %v595 = vmul.f32 %v586, 1.442695
  %v596 = vpow.pop %v595
  %v597 = vmul.f32 %v587, 1.442695
  %v598 = vpow.pop %v597
  %v599 = vmul.f32 %v588, 1.442695
  %v600 = vpow.pop %v599
  %v601 = vsel %vm387, %v590, 0.0
  %602 = vadd.xlane.f32.xlu0 %v601
  %v603 = vpop.xlane.xlu0 %602
  %v604 = vsel %vm387, %v592, 0.0
  %605 = vadd.xlane.f32.xlu0 %v604
  %v606 = vpop.xlane.xlu0 %605
  %v607 = vsel %vm387, %v594, 0.0
  %608 = vadd.xlane.f32.xlu0 %v607
  %v609 = vpop.xlane.xlu0 %608
  %v610 = vsel %vm387, %v596, 0.0
  %611 = vadd.xlane.f32.xlu0 %v610
  %v612 = vpop.xlane.xlu0 %611
  %v613 = vsel %vm387, %v598, 0.0
  %614 = vadd.xlane.f32.xlu0 %v613
  %v615 = vpop.xlane.xlu0 %614
  %v616 = vsel %vm387, %v600, 0.0
  %617 = vadd.xlane.f32.xlu0 %v616
  %v618 = vpop.xlane.xlu0 %617
  %v619 = vrcp.pop %v603
  %v620 = vrcp.pop %v606
  %v621 = vrcp.pop %v609
  %v622 = vrcp.pop %v612
  %v623 = vrcp.pop %v615
  %v624 = vrcp.pop %v618
  %v625 = vmul.f32 %v590, %v619
  %v626 = vmul.f32 %v592, %v620
  %v627 = vmul.f32 %v594, %v621
  %v628 = vmul.f32 %v596, %v622
  %v629 = vmul.f32 %v598, %v623
  %v630 = vmul.f32 %v600, %v624
  %v631 = vpack.c.bf16 %v626, %v625
  %v632 = vpack.c.bf16 %v628, %v627
  %v633 = vpack.c.bf16 %v630, %v629
  %634 = vrot.lane.b32.xlu0 %v323, 48
  %v635 = vpop.permute.xlu0 %634
  %636 = vrot.lane.b32.xlu0 %v324, 48
  %v637 = vpop.permute.xlu0 %636
  %638 = vrot.lane.b32.xlu0 %v325, 48
  %v639 = vpop.permute.xlu0 %638
  %v644 = vsel %vm387, %v631, 0
  %v647 = vsel %vm387, %v632, 0
  %v650 = vsel %vm387, %v633, 0
  %652 = vmatpush.bf16.msra.mxu0 0
  %653 = vmatpush.bf16.msra.mxu0 0
  %654 = vmatpush.bf16.msra.mxu0 0
  %655 = vmatpush.bf16.msra.mxu0 0
  %656 = vmatpush.bf16.msra.mxu0 0
  %657 = vmatpush.bf16.msra.mxu0 %v639
  %658 = vmatpush.bf16.msra.mxu0 %v637
  %659 = vmatpush.bf16.msra.mxu0 %v635
  %660 = vmatmul.bf16.gmra.mxu0 %v644
  %v661 = vpop.f32.mrf.mxu0
  %v662 = vadd.f32 0.0, %v661
  %v663 = vpop.f32.mrf.mxu0
  %v664 = vadd.f32 0.0, %v663
  %665 = vmatmul.bf16.gmra.mxu0 %v647
  %v666 = vpop.f32.mrf.mxu0
  %v667 = vadd.f32 0.0, %v666
  %v668 = vpop.f32.mrf.mxu0
  %v669 = vadd.f32 0.0, %v668
  %670 = vmatmul.bf16.gmra.mxu0 %v650
  %v671 = vpop.f32.mrf.mxu0
  %v672 = vadd.f32 0.0, %v671
  %v673 = vpop.f32.mrf.mxu0
  %v674 = vadd.f32 0.0, %v673
  %675 = vdwg.mxu0
  %682 = vrot.lane.b32.xlu0 %v662, 16
  %v683 = vpop.permute.xlu0 %682
  %684 = vrot.lane.b32.xlu0 %v664, 16
  %v685 = vpop.permute.xlu0 %684
  %686 = vrot.lane.b32.xlu0 %v667, 16
  %v687 = vpop.permute.xlu0 %686
  %688 = vrot.lane.b32.xlu0 %v669, 16
  %v689 = vpop.permute.xlu0 %688
  %690 = vrot.lane.b32.xlu0 %v672, 16
  %v691 = vpop.permute.xlu0 %690
  %692 = vrot.lane.b32.xlu0 %v674, 16
  %v693 = vpop.permute.xlu0 %692
  %v700 = vsel %vm332, %v485, %v683
  %v701 = vsel %vm332, %v487, %v685
  %v702 = vsel %vm332, %v490, %v687
  %v703 = vsel %vm332, %v492, %v689
  %v704 = vsel %vm332, %v495, %v691
  %v705 = vsel %vm332, %v497, %v693
  %v706 = vpack.c.bf16 %v701, %v700
  %v707 = vpack.c.bf16 %v703, %v702
  %v708 = vpack.c.bf16 %v705, %v704
  %v713 = vunpack.c.l.b16 %v86
  %v714 = vunpack.c.l.b16 %v87
  %v715 = vunpack.c.l.b16 %v88
  %v716 = vunpack.c.l.b16 %v89
  %v717 = vpack.c.b16 %v714, %v713
  %v718 = vpack.c.b16 %v716, %v715
  %v722 = vsel %vm102, %v706, 0
  %v725 = vsel %vm102, %v707, 0
  %v728 = vsel %vm102, %v708, 0
  %730 = vmatpush.bf16.msra.mxu0 0
  %731 = vmatpush.bf16.msra.mxu0 0
  %732 = vmatpush.bf16.msra.mxu0 0
  %733 = vmatpush.bf16.msra.mxu0 0
  %734 = vmatpush.bf16.msra.mxu0 0
  %735 = vmatpush.bf16.msra.mxu0 0
  %736 = vmatpush.bf16.msra.mxu0 %v718
  %737 = vmatpush.bf16.msra.mxu0 %v717
  %738 = vmatmul.bf16.gmra.mxu0 %v722
  %v739 = vpop.f32.mrf.mxu0
  %v740 = vadd.f32 0.0, %v739
  %v741 = vpop.f32.mrf.mxu0
  %v742 = vadd.f32 0.0, %v741
  %743 = vmatmul.bf16.gmra.mxu0 %v725
  %v744 = vpop.f32.mrf.mxu0
  %v745 = vadd.f32 0.0, %v744
  %v746 = vpop.f32.mrf.mxu0
  %v747 = vadd.f32 0.0, %v746
  %748 = vmatmul.bf16.gmra.mxu0 %v728
  %v749 = vpop.f32.mrf.mxu0
  %v750 = vadd.f32 0.0, %v749
  %v751 = vpop.f32.mrf.mxu0
  %v752 = vadd.f32 0.0, %v751
  %753 = vdwg.mxu0
  %v754 = vadd.f32 %v15, %v740
  %v755 = vadd.f32 %v16, %v742
  %v756 = vadd.f32 %v17, %v745
  %v757 = vadd.f32 %v18, %v747
  %v758 = vadd.f32 %v19, %v750
  %v759 = vadd.f32 %v20, %v752
  %v760 = vperm.slane %v77, 0
  %v761 = vadd.f32 %v754, %v760
  %v762 = vadd.f32 %v755, %v760
  %v763 = vadd.f32 %v756, %v760
  %v764 = vadd.f32 %v757, %v760
  %v765 = vadd.f32 %v758, %v760
  %v766 = vadd.f32 %v759, %v760
  %v767 = vsel %vm102, %v761, 0.0
  %768 = vadd.xlane.f32.xlu0 %v767
  %v769 = vpop.xlane.xlu0 %768
  %v770 = vsel %vm102, %v762, 0.0
  %771 = vadd.xlane.f32.xlu0 %v770
  %v772 = vpop.xlane.xlu0 %771
  %v773 = vsel %vm102, %v763, 0.0
  %774 = vadd.xlane.f32.xlu0 %v773
  %v775 = vpop.xlane.xlu0 %774
  %v776 = vsel %vm102, %v764, 0.0
  %777 = vadd.xlane.f32.xlu0 %v776
  %v778 = vpop.xlane.xlu0 %777
  %v779 = vsel %vm102, %v765, 0.0
  %780 = vadd.xlane.f32.xlu0 %v779
  %v781 = vpop.xlane.xlu0 %780
  %v782 = vsel %vm102, %v766, 0.0
  %783 = vadd.xlane.f32.xlu0 %v782
  %v784 = vpop.xlane.xlu0 %783
  %v785 = vmul.f32 %v769, %v127
  %v786 = vmul.f32 %v772, %v127
  %v787 = vmul.f32 %v775, %v127
  %v788 = vmul.f32 %v778, %v127
  %v789 = vmul.f32 %v781, %v127
  %v790 = vmul.f32 %v784, %v127
  %v791 = vsub.f32 %v761, %v785
  %v792 = vsub.f32 %v762, %v786
  %v793 = vsub.f32 %v763, %v787
  %v794 = vsub.f32 %v764, %v788
  %v795 = vsub.f32 %v765, %v789
  %v796 = vsub.f32 %v766, %v790
  %v797 = vmul.f32 %v791, %v791
  %v798 = vmul.f32 %v792, %v792
  %v799 = vmul.f32 %v793, %v793
  %v800 = vmul.f32 %v794, %v794
  %v801 = vmul.f32 %v795, %v795
  %v802 = vmul.f32 %v796, %v796
  %v803 = vsel %vm102, %v797, 0.0
  %804 = vadd.xlane.f32.xlu0 %v803
  %v805 = vpop.xlane.xlu0 %804
  %v806 = vsel %vm102, %v798, 0.0
  %807 = vadd.xlane.f32.xlu0 %v806
  %v808 = vpop.xlane.xlu0 %807
  %v809 = vsel %vm102, %v799, 0.0
  %810 = vadd.xlane.f32.xlu0 %v809
  %v811 = vpop.xlane.xlu0 %810
  %v812 = vsel %vm102, %v800, 0.0
  %813 = vadd.xlane.f32.xlu0 %v812
  %v814 = vpop.xlane.xlu0 %813
  %v815 = vsel %vm102, %v801, 0.0
  %816 = vadd.xlane.f32.xlu0 %v815
  %v817 = vpop.xlane.xlu0 %816
  %v818 = vsel %vm102, %v802, 0.0
  %819 = vadd.xlane.f32.xlu0 %v818
  %v820 = vpop.xlane.xlu0 %819
  %v821 = vmul.f32 %v805, %v127
  %v822 = vmul.f32 %v808, %v127
  %v823 = vmul.f32 %v811, %v127
  %v824 = vmul.f32 %v814, %v127
  %v825 = vmul.f32 %v817, %v127
  %v826 = vmul.f32 %v820, %v127
  %v827 = vadd.f32 %v821, 1e-05
  %v828 = vadd.f32 %v822, 1e-05
  %v829 = vadd.f32 %v823, 1e-05
  %v830 = vadd.f32 %v824, 1e-05
  %v831 = vadd.f32 %v825, 1e-05
  %v832 = vadd.f32 %v826, 1e-05
  %v833 = vrsqrt.pop %v827
  %v834 = vmul.f32 %v833, %v827
  %v835 = vmul.f32 %v834, %v833
  %v836 = vmul.f32 0.5, %v835
  %v837 = vsub.f32 1.5, %v836
  %v838 = vmul.f32 %v833, %v837
  %vm839 = vweird.f32 %v827
  %vm840 = vweird.f32 %v833
  %vm841 = vmor %vm839, %vm840
  %v842 = vsel %vm841, %v833, %v838
  %v843 = vrsqrt.pop %v828
  %v844 = vmul.f32 %v843, %v828
  %v845 = vmul.f32 %v844, %v843
  %v846 = vmul.f32 0.5, %v845
  %v847 = vsub.f32 1.5, %v846
  %v848 = vmul.f32 %v843, %v847
  %vm849 = vweird.f32 %v828
  %vm850 = vweird.f32 %v843
  %vm851 = vmor %vm849, %vm850
  %v852 = vsel %vm851, %v843, %v848
  %v853 = vrsqrt.pop %v829
  %v854 = vmul.f32 %v853, %v829
  %v855 = vmul.f32 %v854, %v853
  %v856 = vmul.f32 0.5, %v855
  %v857 = vsub.f32 1.5, %v856
  %v858 = vmul.f32 %v853, %v857
  %vm859 = vweird.f32 %v829
  %vm860 = vweird.f32 %v853
  %vm861 = vmor %vm859, %vm860
  %v862 = vsel %vm861, %v853, %v858
  %v863 = vrsqrt.pop %v830
  %v864 = vmul.f32 %v863, %v830
  %v865 = vmul.f32 %v864, %v863
  %v866 = vmul.f32 0.5, %v865
  %v867 = vsub.f32 1.5, %v866
  %v868 = vmul.f32 %v863, %v867
  %vm869 = vweird.f32 %v830
  %vm870 = vweird.f32 %v863
  %vm871 = vmor %vm869, %vm870
  %v872 = vsel %vm871, %v863, %v868
  %v873 = vrsqrt.pop %v831
  %v874 = vmul.f32 %v873, %v831
  %v875 = vmul.f32 %v874, %v873
  %v876 = vmul.f32 0.5, %v875
  %v877 = vsub.f32 1.5, %v876
  %v878 = vmul.f32 %v873, %v877
  %vm879 = vweird.f32 %v831
  %vm880 = vweird.f32 %v873
  %vm881 = vmor %vm879, %vm880
  %v882 = vsel %vm881, %v873, %v878
  %v883 = vrsqrt.pop %v832
  %v884 = vmul.f32 %v883, %v832
  %v885 = vmul.f32 %v884, %v883
  %v886 = vmul.f32 0.5, %v885
  %v887 = vsub.f32 1.5, %v886
  %v888 = vmul.f32 %v883, %v887
  %vm889 = vweird.f32 %v832
  %vm890 = vweird.f32 %v883
  %vm891 = vmor %vm889, %vm890
  %v892 = vsel %vm891, %v883, %v888
  %v893 = vmul.f32 %v791, %v842
  %v894 = vmul.f32 %v792, %v852
  %v895 = vmul.f32 %v793, %v862
  %v896 = vmul.f32 %v794, %v872
  %v897 = vmul.f32 %v795, %v882
  %v898 = vmul.f32 %v796, %v892
  %v899 = vperm.slane %v78, 0
  %v900 = vmul.f32 %v893, %v899
  %v901 = vmul.f32 %v894, %v899
  %v902 = vmul.f32 %v895, %v899
  %v903 = vmul.f32 %v896, %v899
  %v904 = vmul.f32 %v897, %v899
  %v905 = vmul.f32 %v898, %v899
  %v906 = vperm.slane %v79, 0
  %v907 = vadd.f32 %v900, %v906
  %v908 = vadd.f32 %v901, %v906
  %v909 = vadd.f32 %v902, %v906
  %v910 = vadd.f32 %v903, %v906
  %v911 = vadd.f32 %v904, %v906
  %v912 = vadd.f32 %v905, %v906
  %v913 = vpack.c.bf16 %v908, %v907
  %v914 = vpack.c.bf16 %v910, %v909
  %v915 = vpack.c.bf16 %v912, %v911
  %v916 = vperm.slane %v80, 0
  %v921 = vunpack.c.l.b16 %v90
  %v922 = vunpack.c.l.b16 %v91
  %v923 = vunpack.c.l.b16 %v92
  %v924 = vunpack.c.l.b16 %v93
  %v925 = vpack.c.b16 %v922, %v921
  %v926 = vpack.c.b16 %v924, %v923
  %v930 = vsel %vm102, %v913, 0
  %v933 = vsel %vm102, %v914, 0
  %v936 = vsel %vm102, %v915, 0
  %938 = vmatpush.bf16.msra.mxu0 0
  %939 = vmatpush.bf16.msra.mxu0 0
  %940 = vmatpush.bf16.msra.mxu0 0
  %941 = vmatpush.bf16.msra.mxu0 0
  %942 = vmatpush.bf16.msra.mxu0 0
  %943 = vmatpush.bf16.msra.mxu0 0
  %944 = vmatpush.bf16.msra.mxu0 %v926
  %945 = vmatpush.bf16.msra.mxu0 %v925
  %946 = vmatmul.bf16.gmra.mxu0 %v930
  %v947 = vpop.f32.mrf.mxu0
  %v948 = vadd.f32 %v916, %v947
  %v949 = vpop.f32.mrf.mxu0
  %v950 = vadd.f32 %v916, %v949
  %951 = vmatmul.bf16.gmra.mxu0 %v933
  %v952 = vpop.f32.mrf.mxu0
  %v953 = vadd.f32 %v916, %v952
  %v954 = vpop.f32.mrf.mxu0
  %v955 = vadd.f32 %v916, %v954
  %956 = vmatmul.bf16.gmra.mxu0 %v936
  %v957 = vpop.f32.mrf.mxu0
  %v958 = vadd.f32 %v916, %v957
  %v959 = vpop.f32.mrf.mxu0
  %v960 = vadd.f32 %v916, %v959
  %961 = vdwg.mxu0
  %v962 = vmax.f32 %v948, 0.0
  %v963 = vmax.f32 %v950, 0.0
  %v964 = vmax.f32 %v953, 0.0
  %v965 = vmax.f32 %v955, 0.0
  %v966 = vmax.f32 %v958, 0.0
  %v967 = vmax.f32 %v960, 0.0
  %v968 = vpack.c.bf16 %v963, %v962
  %v969 = vpack.c.bf16 %v965, %v964
  %v970 = vpack.c.bf16 %v967, %v966
  %v979 = vunpack.c.l.b16 %v94
  %v980 = vunpack.c.l.b16 %v95
  %v981 = vunpack.c.l.b16 %v96
  %v982 = vunpack.c.l.b16 %v97
  %v983 = vunpack.c.l.b16 %v98
  %v984 = vunpack.c.l.b16 %v99
  %v985 = vunpack.c.l.b16 %v100
  %v986 = vunpack.c.l.b16 %v101
  %v987 = vpack.c.b16 %v980, %v979
  %v988 = vpack.c.b16 %v982, %v981
  %v989 = vpack.c.b16 %v984, %v983
  %v990 = vpack.c.b16 %v986, %v985
  %vm995 = vcmask 523264
  %v997 = vsel %vm995, %v968, 0
  %v1000 = vsel %vm995, %v969, 0
  %v1003 = vsel %vm995, %v970, 0
  %1005 = vmatpush.bf16.msra.mxu0 0
  %1006 = vmatpush.bf16.msra.mxu0 0
  %1007 = vmatpush.bf16.msra.mxu0 0
  %1008 = vmatpush.bf16.msra.mxu0 0
  %1009 = vmatpush.bf16.msra.mxu0 %v990
  %1010 = vmatpush.bf16.msra.mxu0 %v989
  %1011 = vmatpush.bf16.msra.mxu0 %v988
  %1012 = vmatpush.bf16.msra.mxu0 %v987
  %1013 = vmatmul.bf16.gmra.mxu0 %v997
  %v1014 = vpop.f32.mrf.mxu0
  %v1015 = vadd.f32 0.0, %v1014
  %v1016 = vpop.f32.mrf.mxu0
  %v1017 = vadd.f32 0.0, %v1016
  %1018 = vmatmul.bf16.gmra.mxu0 %v1000
  %v1019 = vpop.f32.mrf.mxu0
  %v1020 = vadd.f32 0.0, %v1019
  %v1021 = vpop.f32.mrf.mxu0
  %v1022 = vadd.f32 0.0, %v1021
  %1023 = vmatmul.bf16.gmra.mxu0 %v1003
  %v1024 = vpop.f32.mrf.mxu0
  %v1025 = vadd.f32 0.0, %v1024
  %v1026 = vpop.f32.mrf.mxu0
  %v1027 = vadd.f32 0.0, %v1026
  %1028 = vdwg.mxu0
  %v1029 = vadd.f32 %v761, %v1015
  %v1030 = vadd.f32 %v762, %v1017
  %v1031 = vadd.f32 %v763, %v1020
  %v1032 = vadd.f32 %v764, %v1022
  %v1033 = vadd.f32 %v765, %v1025
  %v1034 = vadd.f32 %v766, %v1027
  %v1035 = vperm.slane %v81, 0
  %v1036 = vadd.f32 %v1029, %v1035
  %v1037 = vadd.f32 %v1030, %v1035
  %v1038 = vadd.f32 %v1031, %v1035
  %v1039 = vadd.f32 %v1032, %v1035
  %v1040 = vadd.f32 %v1033, %v1035
  %v1041 = vadd.f32 %v1034, %v1035
  %v1042 = vld [vmem:[%s1 + $0x8] sm:$0x1]
  %v1043 = vld [vmem:[%s1 + $0x9] sm:$0x1]
  %v1044 = vld [vmem:[%s1 + $0xa] sm:$0x1]
  %v1045 = vld [vmem:[%s1 + $0xb] sm:$0x1]
  %v1046 = vld [vmem:[%s1 + $0xc] sm:$0x1]
  %v1047 = vld [vmem:[%s1 + $0xd] sm:$0x1]
  %v1048 = vld [vmem:[%s1 + $0xe] sm:$0x1]
  %v1049 = vld [vmem:[%s1 + $0xf] sm:$0x1]
  %v1050 = vld [vmem:[%s2 + $0x50] sm:$0xf]
  %v1051 = vld [vmem:[%s2 + $0x54] sm:$0xf]
  %v1052 = vld [vmem:[%s2 + $0x58] sm:$0xf]
  %v1053 = vld [vmem:[%s2 + $0x5c] sm:$0xf]
  %v1054 = vld [vmem:[%s2 + $0x60] sm:$0xf]
  %v1055 = vld [vmem:[%s2 + $0x64] sm:$0xf]
  %v1056 = vld [vmem:[%s2 + $0x68] sm:$0xf]
  %v1057 = vld [vmem:[%s2 + $0x6c] sm:$0xf]
  %v1058 = vld [vmem:[%s2 + $0x70] sm:$0xf]
  %v1059 = vld [vmem:[%s2 + $0x74] sm:$0xf]
  %v1060 = vld [vmem:[%s2 + $0x78] sm:$0xf]
  %v1061 = vld [vmem:[%s2 + $0x7c] sm:$0xf]
  %v1062 = vld [vmem:[%s2 + $0x80] sm:$0xf]
  %v1063 = vld [vmem:[%s2 + $0x84] sm:$0xf]
  %v1064 = vld [vmem:[%s2 + $0x88] sm:$0xf]
  %v1065 = vld [vmem:[%s2 + $0x8c] sm:$0xf]
  %v1066 = vld [vmem:[%s2 + $0x90] sm:$0xf]
  %v1067 = vld [vmem:[%s2 + $0x94] sm:$0xf]
  %v1068 = vld [vmem:[%s2 + $0x98] sm:$0xf]
  %v1069 = vld [vmem:[%s2 + $0x9c] sm:$0xf]
  %v1070 = vsel %vm102, %v1036, 0.0
  %1071 = vadd.xlane.f32.xlu0 %v1070
  %v1072 = vpop.xlane.xlu0 %1071
  %v1073 = vsel %vm102, %v1037, 0.0
  %1074 = vadd.xlane.f32.xlu0 %v1073
  %v1075 = vpop.xlane.xlu0 %1074
  %v1076 = vsel %vm102, %v1038, 0.0
  %1077 = vadd.xlane.f32.xlu0 %v1076
  %v1078 = vpop.xlane.xlu0 %1077
  %v1079 = vsel %vm102, %v1039, 0.0
  %1080 = vadd.xlane.f32.xlu0 %v1079
  %v1081 = vpop.xlane.xlu0 %1080
  %v1082 = vsel %vm102, %v1040, 0.0
  %1083 = vadd.xlane.f32.xlu0 %v1082
  %v1084 = vpop.xlane.xlu0 %1083
  %v1085 = vsel %vm102, %v1041, 0.0
  %1086 = vadd.xlane.f32.xlu0 %v1085
  %v1087 = vpop.xlane.xlu0 %1086
  %v1088 = vmul.f32 %v1072, %v127
  %v1089 = vmul.f32 %v1075, %v127
  %v1090 = vmul.f32 %v1078, %v127
  %v1091 = vmul.f32 %v1081, %v127
  %v1092 = vmul.f32 %v1084, %v127
  %v1093 = vmul.f32 %v1087, %v127
  %v1094 = vsub.f32 %v1036, %v1088
  %v1095 = vsub.f32 %v1037, %v1089
  %v1096 = vsub.f32 %v1038, %v1090
  %v1097 = vsub.f32 %v1039, %v1091
  %v1098 = vsub.f32 %v1040, %v1092
  %v1099 = vsub.f32 %v1041, %v1093
  %v1100 = vmul.f32 %v1094, %v1094
  %v1101 = vmul.f32 %v1095, %v1095
  %v1102 = vmul.f32 %v1096, %v1096
  %v1103 = vmul.f32 %v1097, %v1097
  %v1104 = vmul.f32 %v1098, %v1098
  %v1105 = vmul.f32 %v1099, %v1099
  %v1106 = vsel %vm102, %v1100, 0.0
  %1107 = vadd.xlane.f32.xlu0 %v1106
  %v1108 = vpop.xlane.xlu0 %1107
  %v1109 = vsel %vm102, %v1101, 0.0
  %1110 = vadd.xlane.f32.xlu0 %v1109
  %v1111 = vpop.xlane.xlu0 %1110
  %v1112 = vsel %vm102, %v1102, 0.0
  %1113 = vadd.xlane.f32.xlu0 %v1112
  %v1114 = vpop.xlane.xlu0 %1113
  %v1115 = vsel %vm102, %v1103, 0.0
  %1116 = vadd.xlane.f32.xlu0 %v1115
  %v1117 = vpop.xlane.xlu0 %1116
  %v1118 = vsel %vm102, %v1104, 0.0
  %1119 = vadd.xlane.f32.xlu0 %v1118
  %v1120 = vpop.xlane.xlu0 %1119
  %v1121 = vsel %vm102, %v1105, 0.0
  %1122 = vadd.xlane.f32.xlu0 %v1121
  %v1123 = vpop.xlane.xlu0 %1122
  %v1124 = vmul.f32 %v1108, %v127
  %v1125 = vmul.f32 %v1111, %v127
  %v1126 = vmul.f32 %v1114, %v127
  %v1127 = vmul.f32 %v1117, %v127
  %v1128 = vmul.f32 %v1120, %v127
  %v1129 = vmul.f32 %v1123, %v127
  %v1130 = vadd.f32 %v1124, 1e-05
  %v1131 = vadd.f32 %v1125, 1e-05
  %v1132 = vadd.f32 %v1126, 1e-05
  %v1133 = vadd.f32 %v1127, 1e-05
  %v1134 = vadd.f32 %v1128, 1e-05
  %v1135 = vadd.f32 %v1129, 1e-05
  %v1136 = vrsqrt.pop %v1130
  %v1137 = vmul.f32 %v1136, %v1130
  %v1138 = vmul.f32 %v1137, %v1136
  %v1139 = vmul.f32 0.5, %v1138
  %v1140 = vsub.f32 1.5, %v1139
  %v1141 = vmul.f32 %v1136, %v1140
  %vm1142 = vweird.f32 %v1130
  %vm1143 = vweird.f32 %v1136
  %vm1144 = vmor %vm1142, %vm1143
  %v1145 = vsel %vm1144, %v1136, %v1141
  %v1146 = vrsqrt.pop %v1131
  %v1147 = vmul.f32 %v1146, %v1131
  %v1148 = vmul.f32 %v1147, %v1146
  %v1149 = vmul.f32 0.5, %v1148
  %v1150 = vsub.f32 1.5, %v1149
  %v1151 = vmul.f32 %v1146, %v1150
  %vm1152 = vweird.f32 %v1131
  %vm1153 = vweird.f32 %v1146
  %vm1154 = vmor %vm1152, %vm1153
  %v1155 = vsel %vm1154, %v1146, %v1151
  %v1156 = vrsqrt.pop %v1132
  %v1157 = vmul.f32 %v1156, %v1132
  %v1158 = vmul.f32 %v1157, %v1156
  %v1159 = vmul.f32 0.5, %v1158
  %v1160 = vsub.f32 1.5, %v1159
  %v1161 = vmul.f32 %v1156, %v1160
  %vm1162 = vweird.f32 %v1132
  %vm1163 = vweird.f32 %v1156
  %vm1164 = vmor %vm1162, %vm1163
  %v1165 = vsel %vm1164, %v1156, %v1161
  %v1166 = vrsqrt.pop %v1133
  %v1167 = vmul.f32 %v1166, %v1133
  %v1168 = vmul.f32 %v1167, %v1166
  %v1169 = vmul.f32 0.5, %v1168
  %v1170 = vsub.f32 1.5, %v1169
  %v1171 = vmul.f32 %v1166, %v1170
  %vm1172 = vweird.f32 %v1133
  %vm1173 = vweird.f32 %v1166
  %vm1174 = vmor %vm1172, %vm1173
  %v1175 = vsel %vm1174, %v1166, %v1171
  %v1176 = vrsqrt.pop %v1134
  %v1177 = vmul.f32 %v1176, %v1134
  %v1178 = vmul.f32 %v1177, %v1176
  %v1179 = vmul.f32 0.5, %v1178
  %v1180 = vsub.f32 1.5, %v1179
  %v1181 = vmul.f32 %v1176, %v1180
  %vm1182 = vweird.f32 %v1134
  %vm1183 = vweird.f32 %v1176
  %vm1184 = vmor %vm1182, %vm1183
  %v1185 = vsel %vm1184, %v1176, %v1181
  %v1186 = vrsqrt.pop %v1135
  %v1187 = vmul.f32 %v1186, %v1135
  %v1188 = vmul.f32 %v1187, %v1186
  %v1189 = vmul.f32 0.5, %v1188
  %v1190 = vsub.f32 1.5, %v1189
  %v1191 = vmul.f32 %v1186, %v1190
  %vm1192 = vweird.f32 %v1135
  %vm1193 = vweird.f32 %v1186
  %vm1194 = vmor %vm1192, %vm1193
  %v1195 = vsel %vm1194, %v1186, %v1191
  %v1196 = vmul.f32 %v1094, %v1145
  %v1197 = vmul.f32 %v1095, %v1155
  %v1198 = vmul.f32 %v1096, %v1165
  %v1199 = vmul.f32 %v1097, %v1175
  %v1200 = vmul.f32 %v1098, %v1185
  %v1201 = vmul.f32 %v1099, %v1195
  %v1202 = vperm.slane %v1042, 0
  %v1203 = vmul.f32 %v1196, %v1202
  %v1204 = vmul.f32 %v1197, %v1202
  %v1205 = vmul.f32 %v1198, %v1202
  %v1206 = vmul.f32 %v1199, %v1202
  %v1207 = vmul.f32 %v1200, %v1202
  %v1208 = vmul.f32 %v1201, %v1202
  %v1209 = vperm.slane %v1043, 0
  %v1210 = vadd.f32 %v1203, %v1209
  %v1211 = vadd.f32 %v1204, %v1209
  %v1212 = vadd.f32 %v1205, %v1209
  %v1213 = vadd.f32 %v1206, %v1209
  %v1214 = vadd.f32 %v1207, %v1209
  %v1215 = vadd.f32 %v1208, %v1209
  %v1216 = vpack.c.bf16 %v1211, %v1210
  %v1217 = vpack.c.bf16 %v1213, %v1212
  %v1218 = vpack.c.bf16 %v1215, %v1214
  %v1219 = vperm.slane %v1044, 0
  %v1224 = vunpack.c.l.b16 %v1050
  %v1225 = vunpack.c.l.b16 %v1051
  %v1226 = vunpack.c.l.b16 %v1052
  %v1227 = vunpack.c.l.b16 %v1053
  %v1228 = vpack.c.b16 %v1225, %v1224
  %v1229 = vpack.c.b16 %v1227, %v1226
  %v1233 = vsel %vm102, %v1216, 0
  %v1236 = vsel %vm102, %v1217, 0
  %v1239 = vsel %vm102, %v1218, 0
  %1241 = vmatpush.bf16.msra.mxu0 0
  %1242 = vmatpush.bf16.msra.mxu0 0
  %1243 = vmatpush.bf16.msra.mxu0 0
  %1244 = vmatpush.bf16.msra.mxu0 0
  %1245 = vmatpush.bf16.msra.mxu0 0
  %1246 = vmatpush.bf16.msra.mxu0 0
  %1247 = vmatpush.bf16.msra.mxu0 %v1229
  %1248 = vmatpush.bf16.msra.mxu0 %v1228
  %1249 = vmatmul.bf16.gmra.mxu0 %v1233
  %v1250 = vpop.f32.mrf.mxu0
  %v1251 = vadd.f32 %v1219, %v1250
  %v1252 = vpop.f32.mrf.mxu0
  %v1253 = vadd.f32 %v1219, %v1252
  %1254 = vmatmul.bf16.gmra.mxu0 %v1236
  %v1255 = vpop.f32.mrf.mxu0
  %v1256 = vadd.f32 %v1219, %v1255
  %v1257 = vpop.f32.mrf.mxu0
  %v1258 = vadd.f32 %v1219, %v1257
  %1259 = vmatmul.bf16.gmra.mxu0 %v1239
  %v1260 = vpop.f32.mrf.mxu0
  %v1261 = vadd.f32 %v1219, %v1260
  %v1262 = vpop.f32.mrf.mxu0
  %v1263 = vadd.f32 %v1219, %v1262
  %1264 = vdwg.mxu0
  %v1265 = vpack.c.bf16 %v1251, %v1251
  %v1266 = vpack.c.bf16 %v1253, %v1253
  %v1267 = vpack.c.bf16 %v1256, %v1256
  %v1268 = vpack.c.bf16 %v1258, %v1258
  %v1269 = vpack.c.bf16 %v1261, %v1261
  %v1270 = vpack.c.bf16 %v1263, %v1263
  %v1277 = vunpack.c.l.b16 %v1265
  %v1278 = vunpack.c.l.b16 %v1266
  %v1279 = vunpack.c.l.b16 %v1267
  %v1280 = vunpack.c.l.b16 %v1268
  %v1281 = vunpack.c.l.b16 %v1269
  %v1282 = vunpack.c.l.b16 %v1270
  %v1283 = vpack.c.b16 %v1278, %v1277
  %v1284 = vpack.c.b16 %v1280, %v1279
  %v1285 = vpack.c.b16 %v1282, %v1281
  %1286 = vrot.lane.b32.xlu0 %v1283, 96
  %v1287 = vpop.permute.xlu0 %1286
  %1288 = vrot.lane.b32.xlu0 %v1284, 96
  %v1289 = vpop.permute.xlu0 %1288
  %1290 = vrot.lane.b32.xlu0 %v1285, 96
  %v1291 = vpop.permute.xlu0 %1290
  %v1293 = vsel %vm332, %v1283, 0
  %v1296 = vsel %vm332, %v1284, 0
  %v1299 = vsel %vm332, %v1285, 0
  %v1302 = vsel %vm332, %v1287, 0
  %v1305 = vsel %vm332, %v1289, 0
  %v1308 = vsel %vm332, %v1291, 0
  %1310 = vmatpush.bf16.xpose.msra.mxu0 0
  %1311 = vmatpush.bf16.xpose.msra.mxu0 0
  %1312 = vmatpush.bf16.xpose.msra.mxu0 0
  %1313 = vmatpush.bf16.xpose.msra.mxu0 0
  %1314 = vmatpush.bf16.xpose.msra.mxu0 0
  %1315 = vmatpush.bf16.xpose.msra.mxu0 %v1308
  %1316 = vmatpush.bf16.xpose.msra.mxu0 %v1305
  %1317 = vmatpush.bf16.xpose.msra.mxu0 %v1302
  %1318 = vmatmul.bf16.gmra.mxu0 %v1293
  %v1319 = vpop.f32.mrf.mxu0
  %v1320 = vadd.f32 0.0, %v1319
  %v1321 = vpop.f32.mrf.mxu0
  %v1322 = vadd.f32 0.0, %v1321
  %1323 = vmatmul.bf16.gmra.mxu0 %v1296
  %v1324 = vpop.f32.mrf.mxu0
  %v1325 = vadd.f32 0.0, %v1324
  %v1326 = vpop.f32.mrf.mxu0
  %v1327 = vadd.f32 0.0, %v1326
  %1328 = vmatmul.bf16.gmra.mxu0 %v1299
  %v1329 = vpop.f32.mrf.mxu0
  %v1330 = vadd.f32 0.0, %v1329
  %v1331 = vpop.f32.mrf.mxu0
  %v1332 = vadd.f32 0.0, %v1331
  %1333 = vdwg.mxu0
  %v1334 = vmul.f32 %v1320, 0.25
  %v1335 = vmul.f32 %v1322, 0.25
  %v1336 = vmul.f32 %v1325, 0.25
  %v1337 = vmul.f32 %v1327, 0.25
  %v1338 = vmul.f32 %v1330, 0.25
  %v1339 = vmul.f32 %v1332, 0.25
  %v1340 = vsel %vm68, %v1334, -1e+09
  %v1341 = vsel %vm69, %v1335, -1e+09
  %v1342 = vsel %vm70, %v1336, -1e+09
  %v1343 = vsel %vm71, %v1337, -1e+09
  %v1344 = vsel %vm72, %v1338, -1e+09
  %v1345 = vsel %vm73, %v1339, -1e+09
  %v1346 = vsel %vm387, %v1340, -inf
  %1347 = vmax.xlane.f32.xlu0 %v1346
  %v1348 = vpop.xlane.xlu0 %1347
  %v1349 = vsel %vm387, %v1341, -inf
  %1350 = vmax.xlane.f32.xlu0 %v1349
  %v1351 = vpop.xlane.xlu0 %1350
  %v1352 = vsel %vm387, %v1342, -inf
  %1353 = vmax.xlane.f32.xlu0 %v1352
  %v1354 = vpop.xlane.xlu0 %1353
  %v1355 = vsel %vm387, %v1343, -inf
  %1356 = vmax.xlane.f32.xlu0 %v1355
  %v1357 = vpop.xlane.xlu0 %1356
  %v1358 = vsel %vm387, %v1344, -inf
  %1359 = vmax.xlane.f32.xlu0 %v1358
  %v1360 = vpop.xlane.xlu0 %1359
  %v1361 = vsel %vm387, %v1345, -inf
  %1362 = vmax.xlane.f32.xlu0 %v1361
  %v1363 = vpop.xlane.xlu0 %1362
  %v1364 = vsub.f32 %v1340, %v1348
  %v1365 = vsub.f32 %v1341, %v1351
  %v1366 = vsub.f32 %v1342, %v1354
  %v1367 = vsub.f32 %v1343, %v1357
  %v1368 = vsub.f32 %v1344, %v1360
  %v1369 = vsub.f32 %v1345, %v1363
  %v1370 = vmul.f32 %v1364, 1.442695
  %v1371 = vpow.pop %v1370
  %v1372 = vmul.f32 %v1365, 1.442695
  %v1373 = vpow.pop %v1372
  %v1374 = vmul.f32 %v1366, 1.442695
  %v1375 = vpow.pop %v1374
  %v1376 = vmul.f32 %v1367, 1.442695
  %v1377 = vpow.pop %v1376
  %v1378 = vmul.f32 %v1368, 1.442695
  %v1379 = vpow.pop %v1378
  %v1380 = vmul.f32 %v1369, 1.442695
  %v1381 = vpow.pop %v1380
  %v1382 = vsel %vm387, %v1371, 0.0
  %1383 = vadd.xlane.f32.xlu0 %v1382
  %v1384 = vpop.xlane.xlu0 %1383
  %v1385 = vsel %vm387, %v1373, 0.0
  %1386 = vadd.xlane.f32.xlu0 %v1385
  %v1387 = vpop.xlane.xlu0 %1386
  %v1388 = vsel %vm387, %v1375, 0.0
  %1389 = vadd.xlane.f32.xlu0 %v1388
  %v1390 = vpop.xlane.xlu0 %1389
  %v1391 = vsel %vm387, %v1377, 0.0
  %1392 = vadd.xlane.f32.xlu0 %v1391
  %v1393 = vpop.xlane.xlu0 %1392
  %v1394 = vsel %vm387, %v1379, 0.0
  %1395 = vadd.xlane.f32.xlu0 %v1394
  %v1396 = vpop.xlane.xlu0 %1395
  %v1397 = vsel %vm387, %v1381, 0.0
  %1398 = vadd.xlane.f32.xlu0 %v1397
  %v1399 = vpop.xlane.xlu0 %1398
  %v1400 = vrcp.pop %v1384
  %v1401 = vrcp.pop %v1387
  %v1402 = vrcp.pop %v1390
  %v1403 = vrcp.pop %v1393
  %v1404 = vrcp.pop %v1396
  %v1405 = vrcp.pop %v1399
  %v1406 = vmul.f32 %v1371, %v1400
  %v1407 = vmul.f32 %v1373, %v1401
  %v1408 = vmul.f32 %v1375, %v1402
  %v1409 = vmul.f32 %v1377, %v1403
  %v1410 = vmul.f32 %v1379, %v1404
  %v1411 = vmul.f32 %v1381, %v1405
  %v1412 = vpack.c.bf16 %v1407, %v1406
  %v1413 = vpack.c.bf16 %v1409, %v1408
  %v1414 = vpack.c.bf16 %v1411, %v1410
  %1415 = vrot.lane.b32.xlu0 %v1283, 64
  %v1416 = vpop.permute.xlu0 %1415
  %1417 = vrot.lane.b32.xlu0 %v1284, 64
  %v1418 = vpop.permute.xlu0 %1417
  %1419 = vrot.lane.b32.xlu0 %v1285, 64
  %v1420 = vpop.permute.xlu0 %1419
  %v1425 = vsel %vm387, %v1412, 0
  %v1428 = vsel %vm387, %v1413, 0
  %v1431 = vsel %vm387, %v1414, 0
  %1433 = vmatpush.bf16.msra.mxu0 0
  %1434 = vmatpush.bf16.msra.mxu0 0
  %1435 = vmatpush.bf16.msra.mxu0 0
  %1436 = vmatpush.bf16.msra.mxu0 0
  %1437 = vmatpush.bf16.msra.mxu0 0
  %1438 = vmatpush.bf16.msra.mxu0 %v1420
  %1439 = vmatpush.bf16.msra.mxu0 %v1418
  %1440 = vmatpush.bf16.msra.mxu0 %v1416
  %1441 = vmatmul.bf16.gmra.mxu0 %v1425
  %v1442 = vpop.f32.mrf.mxu0
  %v1443 = vadd.f32 0.0, %v1442
  %v1444 = vpop.f32.mrf.mxu0
  %v1445 = vadd.f32 0.0, %v1444
  %1446 = vmatmul.bf16.gmra.mxu0 %v1428
  %v1447 = vpop.f32.mrf.mxu0
  %v1448 = vadd.f32 0.0, %v1447
  %v1449 = vpop.f32.mrf.mxu0
  %v1450 = vadd.f32 0.0, %v1449
  %1451 = vmatmul.bf16.gmra.mxu0 %v1431
  %v1452 = vpop.f32.mrf.mxu0
  %v1453 = vadd.f32 0.0, %v1452
  %v1454 = vpop.f32.mrf.mxu0
  %v1455 = vadd.f32 0.0, %v1454
  %1456 = vdwg.mxu0
  %1457 = vrot.lane.b32.xlu0 %v1283, 112
  %v1458 = vpop.permute.xlu0 %1457
  %1459 = vrot.lane.b32.xlu0 %v1284, 112
  %v1460 = vpop.permute.xlu0 %1459
  %1461 = vrot.lane.b32.xlu0 %v1285, 112
  %v1462 = vpop.permute.xlu0 %1461
  %1463 = vrot.lane.b32.xlu0 %v1283, 80
  %v1464 = vpop.permute.xlu0 %1463
  %1465 = vrot.lane.b32.xlu0 %v1284, 80
  %v1466 = vpop.permute.xlu0 %1465
  %1467 = vrot.lane.b32.xlu0 %v1285, 80
  %v1468 = vpop.permute.xlu0 %1467
  %v1470 = vsel %vm332, %v1458, 0
  %v1473 = vsel %vm332, %v1460, 0
  %v1476 = vsel %vm332, %v1462, 0
  %v1479 = vsel %vm332, %v1464, 0
  %v1482 = vsel %vm332, %v1466, 0
  %v1485 = vsel %vm332, %v1468, 0
  %1487 = vmatpush.bf16.xpose.msra.mxu0 0
  %1488 = vmatpush.bf16.xpose.msra.mxu0 0
  %1489 = vmatpush.bf16.xpose.msra.mxu0 0
  %1490 = vmatpush.bf16.xpose.msra.mxu0 0
  %1491 = vmatpush.bf16.xpose.msra.mxu0 0
  %1492 = vmatpush.bf16.xpose.msra.mxu0 %v1485
  %1493 = vmatpush.bf16.xpose.msra.mxu0 %v1482
  %1494 = vmatpush.bf16.xpose.msra.mxu0 %v1479
  %1495 = vmatmul.bf16.gmra.mxu0 %v1470
  %v1496 = vpop.f32.mrf.mxu0
  %v1497 = vadd.f32 0.0, %v1496
  %v1498 = vpop.f32.mrf.mxu0
  %v1499 = vadd.f32 0.0, %v1498
  %1500 = vmatmul.bf16.gmra.mxu0 %v1473
  %v1501 = vpop.f32.mrf.mxu0
  %v1502 = vadd.f32 0.0, %v1501
  %v1503 = vpop.f32.mrf.mxu0
  %v1504 = vadd.f32 0.0, %v1503
  %1505 = vmatmul.bf16.gmra.mxu0 %v1476
  %v1506 = vpop.f32.mrf.mxu0
  %v1507 = vadd.f32 0.0, %v1506
  %v1508 = vpop.f32.mrf.mxu0
  %v1509 = vadd.f32 0.0, %v1508
  %1510 = vdwg.mxu0
  %v1511 = vmul.f32 %v1497, 0.25
  %v1512 = vmul.f32 %v1499, 0.25
  %v1513 = vmul.f32 %v1502, 0.25
  %v1514 = vmul.f32 %v1504, 0.25
  %v1515 = vmul.f32 %v1507, 0.25
  %v1516 = vmul.f32 %v1509, 0.25
  %v1517 = vsel %vm68, %v1511, -1e+09
  %v1518 = vsel %vm69, %v1512, -1e+09
  %v1519 = vsel %vm70, %v1513, -1e+09
  %v1520 = vsel %vm71, %v1514, -1e+09
  %v1521 = vsel %vm72, %v1515, -1e+09
  %v1522 = vsel %vm73, %v1516, -1e+09
  %v1523 = vsel %vm387, %v1517, -inf
  %1524 = vmax.xlane.f32.xlu0 %v1523
  %v1525 = vpop.xlane.xlu0 %1524
  %v1526 = vsel %vm387, %v1518, -inf
  %1527 = vmax.xlane.f32.xlu0 %v1526
  %v1528 = vpop.xlane.xlu0 %1527
  %v1529 = vsel %vm387, %v1519, -inf
  %1530 = vmax.xlane.f32.xlu0 %v1529
  %v1531 = vpop.xlane.xlu0 %1530
  %v1532 = vsel %vm387, %v1520, -inf
  %1533 = vmax.xlane.f32.xlu0 %v1532
  %v1534 = vpop.xlane.xlu0 %1533
  %v1535 = vsel %vm387, %v1521, -inf
  %1536 = vmax.xlane.f32.xlu0 %v1535
  %v1537 = vpop.xlane.xlu0 %1536
  %v1538 = vsel %vm387, %v1522, -inf
  %1539 = vmax.xlane.f32.xlu0 %v1538
  %v1540 = vpop.xlane.xlu0 %1539
  %v1541 = vsub.f32 %v1517, %v1525
  %v1542 = vsub.f32 %v1518, %v1528
  %v1543 = vsub.f32 %v1519, %v1531
  %v1544 = vsub.f32 %v1520, %v1534
  %v1545 = vsub.f32 %v1521, %v1537
  %v1546 = vsub.f32 %v1522, %v1540
  %v1547 = vmul.f32 %v1541, 1.442695
  %v1548 = vpow.pop %v1547
  %v1549 = vmul.f32 %v1542, 1.442695
  %v1550 = vpow.pop %v1549
  %v1551 = vmul.f32 %v1543, 1.442695
  %v1552 = vpow.pop %v1551
  %v1553 = vmul.f32 %v1544, 1.442695
  %v1554 = vpow.pop %v1553
  %v1555 = vmul.f32 %v1545, 1.442695
  %v1556 = vpow.pop %v1555
  %v1557 = vmul.f32 %v1546, 1.442695
  %v1558 = vpow.pop %v1557
  %v1559 = vsel %vm387, %v1548, 0.0
  %1560 = vadd.xlane.f32.xlu0 %v1559
  %v1561 = vpop.xlane.xlu0 %1560
  %v1562 = vsel %vm387, %v1550, 0.0
  %1563 = vadd.xlane.f32.xlu0 %v1562
  %v1564 = vpop.xlane.xlu0 %1563
  %v1565 = vsel %vm387, %v1552, 0.0
  %1566 = vadd.xlane.f32.xlu0 %v1565
  %v1567 = vpop.xlane.xlu0 %1566
  %v1568 = vsel %vm387, %v1554, 0.0
  %1569 = vadd.xlane.f32.xlu0 %v1568
  %v1570 = vpop.xlane.xlu0 %1569
  %v1571 = vsel %vm387, %v1556, 0.0
  %1572 = vadd.xlane.f32.xlu0 %v1571
  %v1573 = vpop.xlane.xlu0 %1572
  %v1574 = vsel %vm387, %v1558, 0.0
  %1575 = vadd.xlane.f32.xlu0 %v1574
  %v1576 = vpop.xlane.xlu0 %1575
  %v1577 = vrcp.pop %v1561
  %v1578 = vrcp.pop %v1564
  %v1579 = vrcp.pop %v1567
  %v1580 = vrcp.pop %v1570
  %v1581 = vrcp.pop %v1573
  %v1582 = vrcp.pop %v1576
  %v1583 = vmul.f32 %v1548, %v1577
  %v1584 = vmul.f32 %v1550, %v1578
  %v1585 = vmul.f32 %v1552, %v1579
  %v1586 = vmul.f32 %v1554, %v1580
  %v1587 = vmul.f32 %v1556, %v1581
  %v1588 = vmul.f32 %v1558, %v1582
  %v1589 = vpack.c.bf16 %v1584, %v1583
  %v1590 = vpack.c.bf16 %v1586, %v1585
  %v1591 = vpack.c.bf16 %v1588, %v1587
  %1592 = vrot.lane.b32.xlu0 %v1283, 48
  %v1593 = vpop.permute.xlu0 %1592
  %1594 = vrot.lane.b32.xlu0 %v1284, 48
  %v1595 = vpop.permute.xlu0 %1594
  %1596 = vrot.lane.b32.xlu0 %v1285, 48
  %v1597 = vpop.permute.xlu0 %1596
  %v1602 = vsel %vm387, %v1589, 0
  %v1605 = vsel %vm387, %v1590, 0
  %v1608 = vsel %vm387, %v1591, 0
  %1610 = vmatpush.bf16.msra.mxu0 0
  %1611 = vmatpush.bf16.msra.mxu0 0
  %1612 = vmatpush.bf16.msra.mxu0 0
  %1613 = vmatpush.bf16.msra.mxu0 0
  %1614 = vmatpush.bf16.msra.mxu0 0
  %1615 = vmatpush.bf16.msra.mxu0 %v1597
  %1616 = vmatpush.bf16.msra.mxu0 %v1595
  %1617 = vmatpush.bf16.msra.mxu0 %v1593
  %1618 = vmatmul.bf16.gmra.mxu0 %v1602
  %v1619 = vpop.f32.mrf.mxu0
  %v1620 = vadd.f32 0.0, %v1619
  %v1621 = vpop.f32.mrf.mxu0
  %v1622 = vadd.f32 0.0, %v1621
  %1623 = vmatmul.bf16.gmra.mxu0 %v1605
  %v1624 = vpop.f32.mrf.mxu0
  %v1625 = vadd.f32 0.0, %v1624
  %v1626 = vpop.f32.mrf.mxu0
  %v1627 = vadd.f32 0.0, %v1626
  %1628 = vmatmul.bf16.gmra.mxu0 %v1608
  %v1629 = vpop.f32.mrf.mxu0
  %v1630 = vadd.f32 0.0, %v1629
  %v1631 = vpop.f32.mrf.mxu0
  %v1632 = vadd.f32 0.0, %v1631
  %1633 = vdwg.mxu0
  %1640 = vrot.lane.b32.xlu0 %v1620, 16
  %v1641 = vpop.permute.xlu0 %1640
  %1642 = vrot.lane.b32.xlu0 %v1622, 16
  %v1643 = vpop.permute.xlu0 %1642
  %1644 = vrot.lane.b32.xlu0 %v1625, 16
  %v1645 = vpop.permute.xlu0 %1644
  %1646 = vrot.lane.b32.xlu0 %v1627, 16
  %v1647 = vpop.permute.xlu0 %1646
  %1648 = vrot.lane.b32.xlu0 %v1630, 16
  %v1649 = vpop.permute.xlu0 %1648
  %1650 = vrot.lane.b32.xlu0 %v1632, 16
  %v1651 = vpop.permute.xlu0 %1650
  %v1658 = vsel %vm332, %v1443, %v1641
  %v1659 = vsel %vm332, %v1445, %v1643
  %v1660 = vsel %vm332, %v1448, %v1645
  %v1661 = vsel %vm332, %v1450, %v1647
  %v1662 = vsel %vm332, %v1453, %v1649
  %v1663 = vsel %vm332, %v1455, %v1651
  %v1664 = vpack.c.bf16 %v1659, %v1658
  %v1665 = vpack.c.bf16 %v1661, %v1660
  %v1666 = vpack.c.bf16 %v1663, %v1662
  %v1671 = vunpack.c.l.b16 %v1054
  %v1672 = vunpack.c.l.b16 %v1055
  %v1673 = vunpack.c.l.b16 %v1056
  %v1674 = vunpack.c.l.b16 %v1057
  %v1675 = vpack.c.b16 %v1672, %v1671
  %v1676 = vpack.c.b16 %v1674, %v1673
  %v1680 = vsel %vm102, %v1664, 0
  %v1683 = vsel %vm102, %v1665, 0
  %v1686 = vsel %vm102, %v1666, 0
  %1688 = vmatpush.bf16.msra.mxu0 0
  %1689 = vmatpush.bf16.msra.mxu0 0
  %1690 = vmatpush.bf16.msra.mxu0 0
  %1691 = vmatpush.bf16.msra.mxu0 0
  %1692 = vmatpush.bf16.msra.mxu0 0
  %1693 = vmatpush.bf16.msra.mxu0 0
  %1694 = vmatpush.bf16.msra.mxu0 %v1676
  %1695 = vmatpush.bf16.msra.mxu0 %v1675
  %1696 = vmatmul.bf16.gmra.mxu0 %v1680
  %v1697 = vpop.f32.mrf.mxu0
  %v1698 = vadd.f32 0.0, %v1697
  %v1699 = vpop.f32.mrf.mxu0
  %v1700 = vadd.f32 0.0, %v1699
  %1701 = vmatmul.bf16.gmra.mxu0 %v1683
  %v1702 = vpop.f32.mrf.mxu0
  %v1703 = vadd.f32 0.0, %v1702
  %v1704 = vpop.f32.mrf.mxu0
  %v1705 = vadd.f32 0.0, %v1704
  %1706 = vmatmul.bf16.gmra.mxu0 %v1686
  %v1707 = vpop.f32.mrf.mxu0
  %v1708 = vadd.f32 0.0, %v1707
  %v1709 = vpop.f32.mrf.mxu0
  %v1710 = vadd.f32 0.0, %v1709
  %1711 = vdwg.mxu0
  %v1712 = vadd.f32 %v1036, %v1698
  %v1713 = vadd.f32 %v1037, %v1700
  %v1714 = vadd.f32 %v1038, %v1703
  %v1715 = vadd.f32 %v1039, %v1705
  %v1716 = vadd.f32 %v1040, %v1708
  %v1717 = vadd.f32 %v1041, %v1710
  %v1718 = vperm.slane %v1045, 0
  %v1719 = vadd.f32 %v1712, %v1718
  %v1720 = vadd.f32 %v1713, %v1718
  %v1721 = vadd.f32 %v1714, %v1718
  %v1722 = vadd.f32 %v1715, %v1718
  %v1723 = vadd.f32 %v1716, %v1718
  %v1724 = vadd.f32 %v1717, %v1718
  %v1725 = vsel %vm102, %v1719, 0.0
  %1726 = vadd.xlane.f32.xlu0 %v1725
  %v1727 = vpop.xlane.xlu0 %1726
  %v1728 = vsel %vm102, %v1720, 0.0
  %1729 = vadd.xlane.f32.xlu0 %v1728
  %v1730 = vpop.xlane.xlu0 %1729
  %v1731 = vsel %vm102, %v1721, 0.0
  %1732 = vadd.xlane.f32.xlu0 %v1731
  %v1733 = vpop.xlane.xlu0 %1732
  %v1734 = vsel %vm102, %v1722, 0.0
  %1735 = vadd.xlane.f32.xlu0 %v1734
  %v1736 = vpop.xlane.xlu0 %1735
  %v1737 = vsel %vm102, %v1723, 0.0
  %1738 = vadd.xlane.f32.xlu0 %v1737
  %v1739 = vpop.xlane.xlu0 %1738
  %v1740 = vsel %vm102, %v1724, 0.0
  %1741 = vadd.xlane.f32.xlu0 %v1740
  %v1742 = vpop.xlane.xlu0 %1741
  %v1743 = vmul.f32 %v1727, %v127
  %v1744 = vmul.f32 %v1730, %v127
  %v1745 = vmul.f32 %v1733, %v127
  %v1746 = vmul.f32 %v1736, %v127
  %v1747 = vmul.f32 %v1739, %v127
  %v1748 = vmul.f32 %v1742, %v127
  %v1749 = vsub.f32 %v1719, %v1743
  %v1750 = vsub.f32 %v1720, %v1744
  %v1751 = vsub.f32 %v1721, %v1745
  %v1752 = vsub.f32 %v1722, %v1746
  %v1753 = vsub.f32 %v1723, %v1747
  %v1754 = vsub.f32 %v1724, %v1748
  %v1755 = vmul.f32 %v1749, %v1749
  %v1756 = vmul.f32 %v1750, %v1750
  %v1757 = vmul.f32 %v1751, %v1751
  %v1758 = vmul.f32 %v1752, %v1752
  %v1759 = vmul.f32 %v1753, %v1753
  %v1760 = vmul.f32 %v1754, %v1754
  %v1761 = vsel %vm102, %v1755, 0.0
  %1762 = vadd.xlane.f32.xlu0 %v1761
  %v1763 = vpop.xlane.xlu0 %1762
  %v1764 = vsel %vm102, %v1756, 0.0
  %1765 = vadd.xlane.f32.xlu0 %v1764
  %v1766 = vpop.xlane.xlu0 %1765
  %v1767 = vsel %vm102, %v1757, 0.0
  %1768 = vadd.xlane.f32.xlu0 %v1767
  %v1769 = vpop.xlane.xlu0 %1768
  %v1770 = vsel %vm102, %v1758, 0.0
  %1771 = vadd.xlane.f32.xlu0 %v1770
  %v1772 = vpop.xlane.xlu0 %1771
  %v1773 = vsel %vm102, %v1759, 0.0
  %1774 = vadd.xlane.f32.xlu0 %v1773
  %v1775 = vpop.xlane.xlu0 %1774
  %v1776 = vsel %vm102, %v1760, 0.0
  %1777 = vadd.xlane.f32.xlu0 %v1776
  %v1778 = vpop.xlane.xlu0 %1777
  %v1779 = vmul.f32 %v1763, %v127
  %v1780 = vmul.f32 %v1766, %v127
  %v1781 = vmul.f32 %v1769, %v127
  %v1782 = vmul.f32 %v1772, %v127
  %v1783 = vmul.f32 %v1775, %v127
  %v1784 = vmul.f32 %v1778, %v127
  %v1785 = vadd.f32 %v1779, 1e-05
  %v1786 = vadd.f32 %v1780, 1e-05
  %v1787 = vadd.f32 %v1781, 1e-05
  %v1788 = vadd.f32 %v1782, 1e-05
  %v1789 = vadd.f32 %v1783, 1e-05
  %v1790 = vadd.f32 %v1784, 1e-05
  %v1791 = vrsqrt.pop %v1785
  %v1792 = vmul.f32 %v1791, %v1785
  %v1793 = vmul.f32 %v1792, %v1791
  %v1794 = vmul.f32 0.5, %v1793
  %v1795 = vsub.f32 1.5, %v1794
  %v1796 = vmul.f32 %v1791, %v1795
  %vm1797 = vweird.f32 %v1785
  %vm1798 = vweird.f32 %v1791
  %vm1799 = vmor %vm1797, %vm1798
  %v1800 = vsel %vm1799, %v1791, %v1796
  %v1801 = vrsqrt.pop %v1786
  %v1802 = vmul.f32 %v1801, %v1786
  %v1803 = vmul.f32 %v1802, %v1801
  %v1804 = vmul.f32 0.5, %v1803
  %v1805 = vsub.f32 1.5, %v1804
  %v1806 = vmul.f32 %v1801, %v1805
  %vm1807 = vweird.f32 %v1786
  %vm1808 = vweird.f32 %v1801
  %vm1809 = vmor %vm1807, %vm1808
  %v1810 = vsel %vm1809, %v1801, %v1806
  %v1811 = vrsqrt.pop %v1787
  %v1812 = vmul.f32 %v1811, %v1787
  %v1813 = vmul.f32 %v1812, %v1811
  %v1814 = vmul.f32 0.5, %v1813
  %v1815 = vsub.f32 1.5, %v1814
  %v1816 = vmul.f32 %v1811, %v1815
  %vm1817 = vweird.f32 %v1787
  %vm1818 = vweird.f32 %v1811
  %vm1819 = vmor %vm1817, %vm1818
  %v1820 = vsel %vm1819, %v1811, %v1816
  %v1821 = vrsqrt.pop %v1788
  %v1822 = vmul.f32 %v1821, %v1788
  %v1823 = vmul.f32 %v1822, %v1821
  %v1824 = vmul.f32 0.5, %v1823
  %v1825 = vsub.f32 1.5, %v1824
  %v1826 = vmul.f32 %v1821, %v1825
  %vm1827 = vweird.f32 %v1788
  %vm1828 = vweird.f32 %v1821
  %vm1829 = vmor %vm1827, %vm1828
  %v1830 = vsel %vm1829, %v1821, %v1826
  %v1831 = vrsqrt.pop %v1789
  %v1832 = vmul.f32 %v1831, %v1789
  %v1833 = vmul.f32 %v1832, %v1831
  %v1834 = vmul.f32 0.5, %v1833
  %v1835 = vsub.f32 1.5, %v1834
  %v1836 = vmul.f32 %v1831, %v1835
  %vm1837 = vweird.f32 %v1789
  %vm1838 = vweird.f32 %v1831
  %vm1839 = vmor %vm1837, %vm1838
  %v1840 = vsel %vm1839, %v1831, %v1836
  %v1841 = vrsqrt.pop %v1790
  %v1842 = vmul.f32 %v1841, %v1790
  %v1843 = vmul.f32 %v1842, %v1841
  %v1844 = vmul.f32 0.5, %v1843
  %v1845 = vsub.f32 1.5, %v1844
  %v1846 = vmul.f32 %v1841, %v1845
  %vm1847 = vweird.f32 %v1790
  %vm1848 = vweird.f32 %v1841
  %vm1849 = vmor %vm1847, %vm1848
  %v1850 = vsel %vm1849, %v1841, %v1846
  %v1851 = vmul.f32 %v1749, %v1800
  %v1852 = vmul.f32 %v1750, %v1810
  %v1853 = vmul.f32 %v1751, %v1820
  %v1854 = vmul.f32 %v1752, %v1830
  %v1855 = vmul.f32 %v1753, %v1840
  %v1856 = vmul.f32 %v1754, %v1850
  %v1857 = vperm.slane %v1046, 0
  %v1858 = vmul.f32 %v1851, %v1857
  %v1859 = vmul.f32 %v1852, %v1857
  %v1860 = vmul.f32 %v1853, %v1857
  %v1861 = vmul.f32 %v1854, %v1857
  %v1862 = vmul.f32 %v1855, %v1857
  %v1863 = vmul.f32 %v1856, %v1857
  %v1864 = vperm.slane %v1047, 0
  %v1865 = vadd.f32 %v1858, %v1864
  %v1866 = vadd.f32 %v1859, %v1864
  %v1867 = vadd.f32 %v1860, %v1864
  %v1868 = vadd.f32 %v1861, %v1864
  %v1869 = vadd.f32 %v1862, %v1864
  %v1870 = vadd.f32 %v1863, %v1864
  %v1871 = vpack.c.bf16 %v1866, %v1865
  %v1872 = vpack.c.bf16 %v1868, %v1867
  %v1873 = vpack.c.bf16 %v1870, %v1869
  %v1874 = vperm.slane %v1048, 0
  %v1879 = vunpack.c.l.b16 %v1058
  %v1880 = vunpack.c.l.b16 %v1059
  %v1881 = vunpack.c.l.b16 %v1060
  %v1882 = vunpack.c.l.b16 %v1061
  %v1883 = vpack.c.b16 %v1880, %v1879
  %v1884 = vpack.c.b16 %v1882, %v1881
  %v1888 = vsel %vm102, %v1871, 0
  %v1891 = vsel %vm102, %v1872, 0
  %v1894 = vsel %vm102, %v1873, 0
  %1896 = vmatpush.bf16.msra.mxu0 0
  %1897 = vmatpush.bf16.msra.mxu0 0
  %1898 = vmatpush.bf16.msra.mxu0 0
  %1899 = vmatpush.bf16.msra.mxu0 0
  %1900 = vmatpush.bf16.msra.mxu0 0
  %1901 = vmatpush.bf16.msra.mxu0 0
  %1902 = vmatpush.bf16.msra.mxu0 %v1884
  %1903 = vmatpush.bf16.msra.mxu0 %v1883
  %1904 = vmatmul.bf16.gmra.mxu0 %v1888
  %v1905 = vpop.f32.mrf.mxu0
  %v1906 = vadd.f32 %v1874, %v1905
  %v1907 = vpop.f32.mrf.mxu0
  %v1908 = vadd.f32 %v1874, %v1907
  %1909 = vmatmul.bf16.gmra.mxu0 %v1891
  %v1910 = vpop.f32.mrf.mxu0
  %v1911 = vadd.f32 %v1874, %v1910
  %v1912 = vpop.f32.mrf.mxu0
  %v1913 = vadd.f32 %v1874, %v1912
  %1914 = vmatmul.bf16.gmra.mxu0 %v1894
  %v1915 = vpop.f32.mrf.mxu0
  %v1916 = vadd.f32 %v1874, %v1915
  %v1917 = vpop.f32.mrf.mxu0
  %v1918 = vadd.f32 %v1874, %v1917
  %1919 = vdwg.mxu0
  %v1920 = vmax.f32 %v1906, 0.0
  %v1921 = vmax.f32 %v1908, 0.0
  %v1922 = vmax.f32 %v1911, 0.0
  %v1923 = vmax.f32 %v1913, 0.0
  %v1924 = vmax.f32 %v1916, 0.0
  %v1925 = vmax.f32 %v1918, 0.0
  %v1926 = vpack.c.bf16 %v1921, %v1920
  %v1927 = vpack.c.bf16 %v1923, %v1922
  %v1928 = vpack.c.bf16 %v1925, %v1924
  %v1937 = vunpack.c.l.b16 %v1062
  %v1938 = vunpack.c.l.b16 %v1063
  %v1939 = vunpack.c.l.b16 %v1064
  %v1940 = vunpack.c.l.b16 %v1065
  %v1941 = vunpack.c.l.b16 %v1066
  %v1942 = vunpack.c.l.b16 %v1067
  %v1943 = vunpack.c.l.b16 %v1068
  %v1944 = vunpack.c.l.b16 %v1069
  %v1945 = vpack.c.b16 %v1938, %v1937
  %v1946 = vpack.c.b16 %v1940, %v1939
  %v1947 = vpack.c.b16 %v1942, %v1941
  %v1948 = vpack.c.b16 %v1944, %v1943
  %v1954 = vsel %vm995, %v1926, 0
  %v1957 = vsel %vm995, %v1927, 0
  %v1960 = vsel %vm995, %v1928, 0
  %1962 = vmatpush.bf16.msra.mxu0 0
  %1963 = vmatpush.bf16.msra.mxu0 0
  %1964 = vmatpush.bf16.msra.mxu0 0
  %1965 = vmatpush.bf16.msra.mxu0 0
  %1966 = vmatpush.bf16.msra.mxu0 %v1948
  %1967 = vmatpush.bf16.msra.mxu0 %v1947
  %1968 = vmatpush.bf16.msra.mxu0 %v1946
  %1969 = vmatpush.bf16.msra.mxu0 %v1945
  %1970 = vmatmul.bf16.gmra.mxu0 %v1954
  %v1971 = vpop.f32.mrf.mxu0
  %v1972 = vadd.f32 0.0, %v1971
  %v1973 = vpop.f32.mrf.mxu0
  %v1974 = vadd.f32 0.0, %v1973
  %1975 = vmatmul.bf16.gmra.mxu0 %v1957
  %v1976 = vpop.f32.mrf.mxu0
  %v1977 = vadd.f32 0.0, %v1976
  %v1978 = vpop.f32.mrf.mxu0
  %v1979 = vadd.f32 0.0, %v1978
  %1980 = vmatmul.bf16.gmra.mxu0 %v1960
  %v1981 = vpop.f32.mrf.mxu0
  %v1982 = vadd.f32 0.0, %v1981
  %v1983 = vpop.f32.mrf.mxu0
  %v1984 = vadd.f32 0.0, %v1983
  %1985 = vdwg.mxu0
  %v1986 = vadd.f32 %v1719, %v1972
  %v1987 = vadd.f32 %v1720, %v1974
  %v1988 = vadd.f32 %v1721, %v1977
  %v1989 = vadd.f32 %v1722, %v1979
  %v1990 = vadd.f32 %v1723, %v1982
  %v1991 = vadd.f32 %v1724, %v1984
  %v1992 = vperm.slane %v1049, 0
  %v1993 = vadd.f32 %v1986, %v1992
  %v1994 = vadd.f32 %v1987, %v1992
  %v1995 = vadd.f32 %v1988, %v1992
  %v1996 = vadd.f32 %v1989, %v1992
  %v1997 = vadd.f32 %v1990, %v1992
  %v1998 = vadd.f32 %v1991, %v1992
  %1999 = vst.msk [vmem:[#allocation2] sm:$0xff] %vm102, %v1993
  %2000 = vst.msk [vmem:[#allocation2 + $0x8] sm:$0xff] %vm102, %v1994
  %2001 = vst.msk [vmem:[#allocation2 + $0x10] sm:$0xff] %vm102, %v1995
  %2002 = vst.msk [vmem:[#allocation2 + $0x18] sm:$0xff] %vm102, %v1996
  %2003 = vst.msk [vmem:[#allocation2 + $0x20] sm:$0xff] %vm102, %v1997
  %2004 = vst.msk [vmem:[#allocation2 + $0x28] sm:$0xff] %vm102, %v1998
  %s2005 = scalar_lea.vmem [#allocation2], 2
  %v2006 = vld [vmem:[%s2005] ss:$3 sm:$0xff]
  %s2007 = scalar_lea.vmem [#allocation2], 26
  %v2008 = vld [vmem:[%s2007] ss:$3 sm:$0xff]
  %v2009 = vld [vmem:[%s1 + $0x10] sm:$0x1]
  %v2010 = vld [vmem:[%s1 + $0x11] sm:$0x1]
  %v2011 = vsel %vm102, %v2006, 0.0
  %2012 = vadd.xlane.f32.xlu0 %v2011
  %v2013 = vpop.xlane.xlu0 %2012
  %v2014 = vsel %vm102, %v2008, 0.0
  %2015 = vadd.xlane.f32.xlu0 %v2014
  %v2016 = vpop.xlane.xlu0 %2015
  %v2017 = vmul.f32 %v2013, %v127
  %v2018 = vmul.f32 %v2016, %v127
  %v2019 = vsub.f32 %v2006, %v2017
  %v2020 = vsub.f32 %v2008, %v2018
  %v2021 = vmul.f32 %v2019, %v2019
  %v2022 = vmul.f32 %v2020, %v2020
  %v2023 = vsel %vm102, %v2021, 0.0
  %2024 = vadd.xlane.f32.xlu0 %v2023
  %v2025 = vpop.xlane.xlu0 %2024
  %v2026 = vsel %vm102, %v2022, 0.0
  %2027 = vadd.xlane.f32.xlu0 %v2026
  %v2028 = vpop.xlane.xlu0 %2027
  %v2029 = vmul.f32 %v2025, %v127
  %v2030 = vmul.f32 %v2028, %v127
  %v2031 = vadd.f32 %v2029, 1e-05
  %v2032 = vadd.f32 %v2030, 1e-05
  %v2033 = vrsqrt.pop %v2031
  %v2034 = vmul.f32 %v2033, %v2031
  %v2035 = vmul.f32 %v2034, %v2033
  %v2036 = vmul.f32 0.5, %v2035
  %v2037 = vsub.f32 1.5, %v2036
  %v2038 = vmul.f32 %v2033, %v2037
  %vm2039 = vweird.f32 %v2031
  %vm2040 = vweird.f32 %v2033
  %vm2041 = vmor %vm2039, %vm2040
  %v2042 = vsel %vm2041, %v2033, %v2038
  %v2043 = vrsqrt.pop %v2032
  %v2044 = vmul.f32 %v2043, %v2032
  %v2045 = vmul.f32 %v2044, %v2043
  %v2046 = vmul.f32 0.5, %v2045
  %v2047 = vsub.f32 1.5, %v2046
  %v2048 = vmul.f32 %v2043, %v2047
  %vm2049 = vweird.f32 %v2032
  %vm2050 = vweird.f32 %v2043
  %vm2051 = vmor %vm2049, %vm2050
  %v2052 = vsel %vm2051, %v2043, %v2048
  %v2053 = vmul.f32 %v2019, %v2042
  %v2054 = vmul.f32 %v2020, %v2052
  %v2055 = vperm.slane %v2009, 0
  %v2056 = vmul.f32 %v2053, %v2055
  %v2057 = vmul.f32 %v2054, %v2055
  %v2058 = vperm.slane %v2010, 0
  %v2059 = vadd.f32 %v2056, %v2058
  %v2060 = vadd.f32 %v2057, %v2058
  %v2061 = vld [vmem:[%s2 + $0xa0] sm:$0xf]
  %v2062 = vld [vmem:[%s2 + $0xa4] sm:$0xf]
  %v2063 = vld [vmem:[%s2 + $0xa8] sm:$0xf]
  %v2064 = vld [vmem:[%s2 + $0xac] sm:$0xf]
  %v2065 = vpack.c.bf16 %v2060, %v2059
  %v2070 = vunpack.c.l.b16 %v2061
  %v2071 = vunpack.c.l.b16 %v2062
  %v2072 = vunpack.c.l.b16 %v2063
  %v2073 = vunpack.c.l.b16 %v2064
  %v2074 = vpack.c.b16 %v2071, %v2070
  %v2075 = vpack.c.b16 %v2073, %v2072
  %v2079 = vsel %vm102, %v2065, 0
  %2081 = vmatpush.bf16.msra.mxu0 0
  %2082 = vmatpush.bf16.msra.mxu0 0
  %2083 = vmatpush.bf16.msra.mxu0 0
  %2084 = vmatpush.bf16.msra.mxu0 0
  %2085 = vmatpush.bf16.msra.mxu0 0
  %2086 = vmatpush.bf16.msra.mxu0 0
  %2087 = vmatpush.bf16.msra.mxu0 %v2075
  %2088 = vmatpush.bf16.msra.mxu0 %v2074
  %2089 = vmatmul.bf16.gmra.mxu0 %v2079
  %v2090 = vpop.f32.mrf.mxu0
  %v2091 = vadd.f32 0.0, %v2090
  %v2092 = vpop.f32.mrf.mxu0
  %v2093 = vadd.f32 0.0, %v2092
  %2094 = vdwg.mxu0
  %2095 = vst [vmem:[%s3] sm:$0xff] %v2091
  %2096 = vst [vmem:[%s3 + $0x8] sm:$0xff] %v2093
  // Predicated region
  $region14: #{decision_transformer_forward.1} parent=0 // pred_check
    _
  $region15: #{decision_transformer_forward.1} parent=0 // pred_check_branch
    %2098 = sbr.rel (0) target = $region17
  $region16: #{decision_transformer_forward.1} parent=0 // pred_region
    _
  $region17: #{decision_transformer_forward.1} parent=0 // pred_fallthru
    _
  // Predicated region
  $region18: #{decision_transformer_forward.1} parent=0 // pred_check
    _
  $region19: #{decision_transformer_forward.1} parent=0 // pred_check_branch
    %2100 = sbr.rel (0) target = $region21
  $region20: #{decision_transformer_forward.1} parent=0 // pred_region
    _
  $region21: #{decision_transformer_forward.1} parent=0 // pred_fallthru
    _

</llo_original>
